<compile_context>
chip_gen: v6e
topology: v6e:2x2x1
jax: 0.10.0
libtpu: 0.0.40
codegen_flags: <defaults>
</compile_context>

<pallas_src>
import functools

import jax
import jax.numpy as jnp
from jax import lax
from jax.experimental import pallas as pl
from jax.experimental.pallas import tpu as pltpu


def _lstm_kernel(x_ref,      # (T*B, D)   time-major flattened input (row = t*B + b)
                 w0x_ref,    # (D, 4H)    layer-0 W_ih^T, g-cols pre-scaled by 2
                 w0h_ref,    # (H, 4H)    layer-0 W_hh^T, g-cols pre-scaled by 2
                 b0_ref,     # (1, 4H)    layer-0 bias (b_ih + b_hh), g-cols x2
                 wih1_ref,   # (H, 4H)    layer-1 W_ih^T, g-cols x2
                 whh1_ref,   # (H, 4H)    layer-1 W_hh^T, g-cols x2
                 b1_ref,     # (1, 4H)    layer-1 bias, g-cols x2
                 wfc_ref,    # (H, Cp)    fc W^T, zero-padded to 128 lanes
                 bfc_ref,    # (1, Cp)    fc bias, zero-padded
                 out_ref):   # (B, Cp)    lane-dense output block
    B = out_ref.shape[0]
    T = x_ref.shape[0] // B
    H = w0h_ref.shape[0]
    G = 4 * H

    # Layer-0 input projection for ALL timesteps in a single MXU pass; bias folded
    # in here, off the recurrent critical path.
    xp = (jnp.dot(x_ref[...], w0x_ref[...], preferred_element_type=jnp.float32)
          + b0_ref[...])                                          # (T*B, 4H)

    # Weights resident for the whole loop.
    w0h = w0h_ref[...]
    wih1 = wih1_ref[...]
    whh1 = whh1_ref[...]
    # Hoisted bias broadcast (JAX does not CSE broadcast_in_dim inside the loop).
    b1b = jnp.broadcast_to(b1_ref[...], (B, G))

    def gates_to_hc(act, c_prev):
        # `act` is sigmoid(z) over the whole (B, 4H) tile.  The g-gate columns of
        # the weights/bias were pre-scaled by 2, so tanh(z_g) == 2*sigmoid(2*z_g)-1.
        i = act[:, 0 * H:1 * H]
        f = act[:, 1 * H:2 * H]
        g = 2.0 * act[:, 2 * H:3 * H] - 1.0
        o = act[:, 3 * H:4 * H]
        c = f * c_prev + i * g
        h = o * jnp.tanh(c)
        return h, c

    z = jnp.zeros((B, H), jnp.float32)
    h0, c0, h1, c1 = z, z, z, z

    for t in range(T):  # static unroll: T is small and known at trace time
        # Layer-1 recurrent half depends only on h1_prev -> issued early so it
        # overlaps layer-0 compute under the unrolled schedule.
        g1_rec = jnp.dot(h1, whh1, preferred_element_type=jnp.float32) + b1b

        # Layer 0: one recurrent matmul per step; input half was precomputed.
        a0 = jax.nn.sigmoid(
            xp[t * B:(t + 1) * B]
            + jnp.dot(h0, w0h, preferred_element_type=jnp.float32))
        h0, c0 = gates_to_hc(a0, c0)

        # Layer 1: only h0_new @ W_ih1 sits on the dependency chain.
        a1 = jax.nn.sigmoid(
            g1_rec + jnp.dot(h0, wih1, preferred_element_type=jnp.float32))
        h1, c1 = gates_to_hc(a1, c1)

    # fc on the final hidden state of the last layer; lane-dense (B, 128) store.
    out_ref[...] = (jnp.dot(h1, wfc_ref[...], preferred_element_type=jnp.float32)
                    + bfc_ref[...]).astype(out_ref.dtype)


def prepare_params(params, num_classes):
    """One-time weight preprocessing (outside the per-call path):
    g-gate column scaling (tanh-via-sigmoid trick) and FC zero-padding to 128 lanes."""
    H = params["whh0_t"].shape[0]
    C = num_classes
    C_pad = ((C + 127) // 128) * 128

    def scale_g(w):
        return w.at[..., 2 * H:3 * H].multiply(2.0)

    return {
        "w0x":  scale_g(params["wih0_t"]),
        "w0h":  scale_g(params["whh0_t"]),
        "b0":   scale_g(params["b0"]),
        "wih1": scale_g(params["wih1_t"]),
        "whh1": scale_g(params["whh1_t"]),
        "b1":   scale_g(params["b1"]),
        "wfc":  jnp.pad(params["wfc_t"], ((0, 0), (0, C_pad - C))),
        "bfc":  jnp.pad(params["bfc"], ((0, 0), (0, C_pad - C))),
    }


@functools.partial(jax.jit, static_argnames=("num_classes",))
def lstm_forward(x_btd, prep, *, num_classes):
    """x_btd: (B, T, D) batch-first, like the PyTorch module. Returns (B, num_classes)."""
    B, T, D = x_btd.shape
    H = prep["w0h"].shape[0]
    C_pad = prep["wfc"].shape[1]

    B_pad = max(8, ((B + 7) // 8) * 8)        # sublane minimum

    # Layout plumbing only (x is tiny): pad batch to 8 sublanes, go time-major and
    # flatten to (T*B_pad, D) so the kernel's layer-0 projection is one 2-D matmul
    # and per-step slices are 8-row aligned.
    x_p = jnp.pad(x_btd, ((0, B_pad - B), (0, 0), (0, 0)))
    x_flat = jnp.transpose(x_p, (1, 0, 2)).reshape(T * B_pad, D)

    # Advisory cost estimate (all static Python ints).
    flops = (2 * T * B_pad * D * 4 * H                # layer-0 input projection
             + T * 3 * 2 * B_pad * H * 4 * H          # 3 recurrent/input dots per step
             + 2 * B_pad * H * C_pad)                 # fc head
    transcendentals = T * 2 * (B_pad * 4 * H + B_pad * H)   # sigmoid + tanh(c) per cell
    weight_elems = sum(prep[k].size for k in
                       ("w0x", "w0h", "b0", "wih1", "whh1", "b1", "wfc", "bfc"))
    bytes_accessed = 4 * (x_flat.size + weight_elems + B_pad * C_pad)

    vmem = pl.BlockSpec(memory_space=pltpu.MemorySpace.VMEM)
    out = pl.pallas_call(
        _lstm_kernel,
        out_shape=jax.ShapeDtypeStruct((B_pad, C_pad), jnp.float32),
        in_specs=[vmem] * 9,
        out_specs=vmem,
        cost_estimate=pl.CostEstimate(flops=flops,
                                      transcendentals=transcendentals,
                                      bytes_accessed=bytes_accessed),
    )(x_flat, prep["w0x"], prep["w0h"], prep["b0"],
      prep["wih1"], prep["whh1"], prep["b1"], prep["wfc"], prep["bfc"])

    return out[:B, :num_classes]


def init_params(key, input_size, hidden_size, num_classes):
    """Deterministic init mimicking PyTorch's uniform(-1/sqrt(H), 1/sqrt(H))."""
    H = hidden_size
    k = 1.0 / jnp.sqrt(jnp.float32(H))
    keys = jax.random.split(key, 10)

    def u(kk, shape):
        return jax.random.uniform(kk, shape, jnp.float32, -k, k)

    # PyTorch stores W_ih (4H, in), W_hh (4H, H); we keep them transposed.
    return {
        "wih0_t": u(keys[0], (input_size, 4 * H)),
        "whh0_t": u(keys[1], (H, 4 * H)),
        "b0":     (u(keys[2], (1, 4 * H)) + u(keys[3], (1, 4 * H))),  # b_ih + b_hh
        "wih1_t": u(keys[4], (H, 4 * H)),
        "whh1_t": u(keys[5], (H, 4 * H)),
        "b1":     (u(keys[6], (1, 4 * H)) + u(keys[7], (1, 4 * H))),
        "wfc_t":  u(keys[8], (H, num_classes)),
        "bfc":    u(keys[9], (1, num_classes)),
    }


def lstm_forward_ref(x_btd, params, hidden_size):
    """Pure-JAX reference (no Pallas, plain tanh gates) for correctness checking."""
    H = hidden_size
    B = x_btd.shape[0]

    def cell(x_t, h_prev, c_prev, wih, whh, b):
        gates = x_t @ wih + h_prev @ whh + b
        i = jax.nn.sigmoid(gates[:, 0 * H:1 * H])
        f = jax.nn.sigmoid(gates[:, 1 * H:2 * H])
        g = jnp.tanh(gates[:, 2 * H:3 * H])
        o = jax.nn.sigmoid(gates[:, 3 * H:4 * H])
        c = f * c_prev + i * g
        h = o * jnp.tanh(c)
        return h, c

    def scan_step(carry, x_t):
        h0, c0, h1, c1 = carry
        h0, c0 = cell(x_t, h0, c0, params["wih0_t"], params["whh0_t"], params["b0"])
        h1, c1 = cell(h0, h1, c1, params["wih1_t"], params["whh1_t"], params["b1"])
        return (h0, c0, h1, c1), None

    z = jnp.zeros((B, H), jnp.float32)
    (_, _, h1, _), _ = lax.scan(scan_step, (z, z, z, z),
                                jnp.transpose(x_btd, (1, 0, 2)))
    return h1 @ params["wfc_t"] + params["bfc"]


if __name__ == "__main__":
    # Small shapes consistent with the module: input_size=4, seq_length=7,
    # num_classes=2, num_layers=2; hidden scaled down 256 -> 32 (4H = 128 lanes).
    batch = 2
    seq_length = 7
    input_size = 4
    hidden_size = 32
    num_classes = 2

    key = jax.random.PRNGKey(0)
    kx, kp = jax.random.split(key)
    x = jax.random.uniform(kx, (batch, seq_length, input_size), jnp.float32)  # MinMax-scaled range [0,1)
    params = init_params(kp, input_size, hidden_size, num_classes)

    prep = prepare_params(params, num_classes)          # one-time weight prep
    out = lstm_forward(x, prep, num_classes=num_classes)
    out = jax.block_until_ready(out)

    ref = lstm_forward_ref(x, params, hidden_size)
    assert out.shape == (batch, num_classes)
    # Tolerance accounts for the tanh(z) == 2*sigmoid(2z)-1 rewrite (abs error ~1e-7
    # per gate, propagated through 7 steps / 2 layers / the FC head).
    assert jnp.allclose(out, ref, atol=5e-4, rtol=5e-4), (out, ref)

    print("KERNEL_OK")
</pallas_src>

<mosaic_0001>
module attributes {stable_mosaic.version = 11 : i64} {
  func.func @_lstm_kernel(%arg0: memref<56x4xf32, #tpu.memory_space<vmem>>, %arg1: memref<4x128xf32, #tpu.memory_space<vmem>>, %arg2: memref<32x128xf32, #tpu.memory_space<vmem>>, %arg3: memref<1x128xf32, #tpu.memory_space<vmem>>, %arg4: memref<32x128xf32, #tpu.memory_space<vmem>>, %arg5: memref<32x128xf32, #tpu.memory_space<vmem>>, %arg6: memref<1x128xf32, #tpu.memory_space<vmem>>, %arg7: memref<32x128xf32, #tpu.memory_space<vmem>>, %arg8: memref<1x128xf32, #tpu.memory_space<vmem>>, %arg9: memref<8x128xf32, #tpu.memory_space<vmem>>) attributes {dimension_semantics = [], scalar_prefetch = 0 : i64, scratch_operands = 0 : i64, tpu.core_type = #tpu.core_type<tc>} {
    %c0 = arith.constant 0 : index
    %c0_0 = arith.constant 0 : index
    %0 = vector.load %arg0[%c0, %c0_0] : memref<56x4xf32, #tpu.memory_space<vmem>>, vector<56x4xf32>
    %c0_1 = arith.constant 0 : index
    %c0_2 = arith.constant 0 : index
    %1 = vector.load %arg1[%c0_1, %c0_2] : memref<4x128xf32, #tpu.memory_space<vmem>>, vector<4x128xf32>
    %cst = arith.constant dense<0.000000e+00> : vector<56x128xf32>
    %2 = tpu.matmul %0, %1, %cst {dimension_numbers = #tpu.dot_dimension_numbers<[1], [0], [0], [1], [0, 0, 1, 1], [], []>} : vector<56x4xf32>, vector<4x128xf32>, vector<56x128xf32> -> vector<56x128xf32>
    %c0_3 = arith.constant 0 : index
    %c0_4 = arith.constant 0 : index
    %3 = vector.load %arg3[%c0_3, %c0_4] : memref<1x128xf32, #tpu.memory_space<vmem>>, vector<1x128xf32>
    %4 = vector.broadcast %3 : vector<1x128xf32> to vector<56x128xf32>
    %5 = arith.addf %2, %4 : vector<56x128xf32>
    %c0_5 = arith.constant 0 : index
    %c0_6 = arith.constant 0 : index
    %6 = vector.load %arg2[%c0_5, %c0_6] : memref<32x128xf32, #tpu.memory_space<vmem>>, vector<32x128xf32>
    %c0_7 = arith.constant 0 : index
    %c0_8 = arith.constant 0 : index
    %7 = vector.load %arg4[%c0_7, %c0_8] : memref<32x128xf32, #tpu.memory_space<vmem>>, vector<32x128xf32>
    %c0_9 = arith.constant 0 : index
    %c0_10 = arith.constant 0 : index
    %8 = vector.load %arg5[%c0_9, %c0_10] : memref<32x128xf32, #tpu.memory_space<vmem>>, vector<32x128xf32>
    %c0_11 = arith.constant 0 : index
    %c0_12 = arith.constant 0 : index
    %9 = vector.load %arg6[%c0_11, %c0_12] : memref<1x128xf32, #tpu.memory_space<vmem>>, vector<1x128xf32>
    %10 = vector.shape_cast %9 : vector<1x128xf32> to vector<1x128xf32>
    %11 = vector.broadcast %10 : vector<1x128xf32> to vector<8x128xf32>
    %cst_13 = arith.constant 0.000000e+00 : f32
    %12 = vector.broadcast %cst_13 : f32 to vector<8x32xf32>
    %cst_14 = arith.constant dense<0.000000e+00> : vector<8x128xf32>
    %13 = tpu.matmul %12, %8, %cst_14 {dimension_numbers = #tpu.dot_dimension_numbers<[1], [0], [0], [1], [0, 0, 1, 1], [], []>} : vector<8x32xf32>, vector<32x128xf32>, vector<8x128xf32> -> vector<8x128xf32>
    %14 = arith.addf %13, %11 : vector<8x128xf32>
    %15 = vector.extract_strided_slice %5 {offsets = [0, 0], sizes = [8, 128], strides = [1, 1]} : vector<56x128xf32> to vector<8x128xf32>
    %cst_15 = arith.constant dense<0.000000e+00> : vector<8x128xf32>
    %16 = tpu.matmul %12, %6, %cst_15 {dimension_numbers = #tpu.dot_dimension_numbers<[1], [0], [0], [1], [0, 0, 1, 1], [], []>} : vector<8x32xf32>, vector<32x128xf32>, vector<8x128xf32> -> vector<8x128xf32>
    %17 = arith.addf %15, %16 : vector<8x128xf32>
    %18 = arith.negf %17 : vector<8x128xf32>
    %19 = math.exp %18 : vector<8x128xf32>
    %cst_16 = arith.constant 1.000000e+00 : f32
    %20 = vector.broadcast %cst_16 : f32 to vector<8x128xf32>
    %21 = arith.addf %20, %19 : vector<8x128xf32>
    %22 = arith.divf %20, %21 : vector<8x128xf32>
    %23 = vector.extract_strided_slice %22 {offsets = [0, 0], sizes = [8, 32], strides = [1, 1]} : vector<8x128xf32> to vector<8x32xf32>
    %24 = vector.extract_strided_slice %22 {offsets = [0, 32], sizes = [8, 32], strides = [1, 1]} : vector<8x128xf32> to vector<8x32xf32>
    %25 = vector.extract_strided_slice %22 {offsets = [0, 64], sizes = [8, 32], strides = [1, 1]} : vector<8x128xf32> to vector<8x32xf32>
    %cst_17 = arith.constant 2.000000e+00 : f32
    %26 = vector.broadcast %cst_17 : f32 to vector<8x32xf32>
    %27 = arith.mulf %26, %25 : vector<8x32xf32>
    %cst_18 = arith.constant 1.000000e+00 : f32
    %28 = vector.broadcast %cst_18 : f32 to vector<8x32xf32>
    %29 = arith.subf %27, %28 : vector<8x32xf32>
    %30 = vector.extract_strided_slice %22 {offsets = [0, 96], sizes = [8, 32], strides = [1, 1]} : vector<8x128xf32> to vector<8x32xf32>
    %31 = arith.mulf %24, %12 : vector<8x32xf32>
    %32 = arith.mulf %23, %29 : vector<8x32xf32>
    %33 = arith.addf %31, %32 : vector<8x32xf32>
    %34 = math.tanh %33 : vector<8x32xf32>
    %35 = arith.mulf %30, %34 : vector<8x32xf32>
    %cst_19 = arith.constant dense<0.000000e+00> : vector<8x128xf32>
    %36 = tpu.matmul %35, %7, %cst_19 {dimension_numbers = #tpu.dot_dimension_numbers<[1], [0], [0], [1], [0, 0, 1, 1], [], []>} : vector<8x32xf32>, vector<32x128xf32>, vector<8x128xf32> -> vector<8x128xf32>
    %37 = arith.addf %14, %36 : vector<8x128xf32>
    %38 = arith.negf %37 : vector<8x128xf32>
    %39 = math.exp %38 : vector<8x128xf32>
    %cst_20 = arith.constant 1.000000e+00 : f32
    %40 = vector.broadcast %cst_20 : f32 to vector<8x128xf32>
    %41 = arith.addf %40, %39 : vector<8x128xf32>
    %42 = arith.divf %40, %41 : vector<8x128xf32>
    %43 = vector.extract_strided_slice %42 {offsets = [0, 0], sizes = [8, 32], strides = [1, 1]} : vector<8x128xf32> to vector<8x32xf32>
    %44 = vector.extract_strided_slice %42 {offsets = [0, 32], sizes = [8, 32], strides = [1, 1]} : vector<8x128xf32> to vector<8x32xf32>
    %45 = vector.extract_strided_slice %42 {offsets = [0, 64], sizes = [8, 32], strides = [1, 1]} : vector<8x128xf32> to vector<8x32xf32>
    %cst_21 = arith.constant 2.000000e+00 : f32
    %46 = vector.broadcast %cst_21 : f32 to vector<8x32xf32>
    %47 = arith.mulf %46, %45 : vector<8x32xf32>
    %cst_22 = arith.constant 1.000000e+00 : f32
    %48 = vector.broadcast %cst_22 : f32 to vector<8x32xf32>
    %49 = arith.subf %47, %48 : vector<8x32xf32>
    %50 = vector.extract_strided_slice %42 {offsets = [0, 96], sizes = [8, 32], strides = [1, 1]} : vector<8x128xf32> to vector<8x32xf32>
    %51 = arith.mulf %44, %12 : vector<8x32xf32>
    %52 = arith.mulf %43, %49 : vector<8x32xf32>
    %53 = arith.addf %51, %52 : vector<8x32xf32>
    %54 = math.tanh %53 : vector<8x32xf32>
    %55 = arith.mulf %50, %54 : vector<8x32xf32>
    %cst_23 = arith.constant dense<0.000000e+00> : vector<8x128xf32>
    %56 = tpu.matmul %55, %8, %cst_23 {dimension_numbers = #tpu.dot_dimension_numbers<[1], [0], [0], [1], [0, 0, 1, 1], [], []>} : vector<8x32xf32>, vector<32x128xf32>, vector<8x128xf32> -> vector<8x128xf32>
    %57 = arith.addf %56, %11 : vector<8x128xf32>
    %58 = vector.extract_strided_slice %5 {offsets = [8, 0], sizes = [8, 128], strides = [1, 1]} : vector<56x128xf32> to vector<8x128xf32>
    %cst_24 = arith.constant dense<0.000000e+00> : vector<8x128xf32>
    %59 = tpu.matmul %35, %6, %cst_24 {dimension_numbers = #tpu.dot_dimension_numbers<[1], [0], [0], [1], [0, 0, 1, 1], [], []>} : vector<8x32xf32>, vector<32x128xf32>, vector<8x128xf32> -> vector<8x128xf32>
    %60 = arith.addf %58, %59 : vector<8x128xf32>
    %61 = arith.negf %60 : vector<8x128xf32>
    %62 = math.exp %61 : vector<8x128xf32>
    %cst_25 = arith.constant 1.000000e+00 : f32
    %63 = vector.broadcast %cst_25 : f32 to vector<8x128xf32>
    %64 = arith.addf %63, %62 : vector<8x128xf32>
    %65 = arith.divf %63, %64 : vector<8x128xf32>
    %66 = vector.extract_strided_slice %65 {offsets = [0, 0], sizes = [8, 32], strides = [1, 1]} : vector<8x128xf32> to vector<8x32xf32>
    %67 = vector.extract_strided_slice %65 {offsets = [0, 32], sizes = [8, 32], strides = [1, 1]} : vector<8x128xf32> to vector<8x32xf32>
    %68 = vector.extract_strided_slice %65 {offsets = [0, 64], sizes = [8, 32], strides = [1, 1]} : vector<8x128xf32> to vector<8x32xf32>
    %cst_26 = arith.constant 2.000000e+00 : f32
    %69 = vector.broadcast %cst_26 : f32 to vector<8x32xf32>
    %70 = arith.mulf %69, %68 : vector<8x32xf32>
    %cst_27 = arith.constant 1.000000e+00 : f32
    %71 = vector.broadcast %cst_27 : f32 to vector<8x32xf32>
    %72 = arith.subf %70, %71 : vector<8x32xf32>
    %73 = vector.extract_strided_slice %65 {offsets = [0, 96], sizes = [8, 32], strides = [1, 1]} : vector<8x128xf32> to vector<8x32xf32>
    %74 = arith.mulf %67, %33 : vector<8x32xf32>
    %75 = arith.mulf %66, %72 : vector<8x32xf32>
    %76 = arith.addf %74, %75 : vector<8x32xf32>
    %77 = math.tanh %76 : vector<8x32xf32>
    %78 = arith.mulf %73, %77 : vector<8x32xf32>
    %cst_28 = arith.constant dense<0.000000e+00> : vector<8x128xf32>
    %79 = tpu.matmul %78, %7, %cst_28 {dimension_numbers = #tpu.dot_dimension_numbers<[1], [0], [0], [1], [0, 0, 1, 1], [], []>} : vector<8x32xf32>, vector<32x128xf32>, vector<8x128xf32> -> vector<8x128xf32>
    %80 = arith.addf %57, %79 : vector<8x128xf32>
    %81 = arith.negf %80 : vector<8x128xf32>
    %82 = math.exp %81 : vector<8x128xf32>
    %cst_29 = arith.constant 1.000000e+00 : f32
    %83 = vector.broadcast %cst_29 : f32 to vector<8x128xf32>
    %84 = arith.addf %83, %82 : vector<8x128xf32>
    %85 = arith.divf %83, %84 : vector<8x128xf32>
    %86 = vector.extract_strided_slice %85 {offsets = [0, 0], sizes = [8, 32], strides = [1, 1]} : vector<8x128xf32> to vector<8x32xf32>
    %87 = vector.extract_strided_slice %85 {offsets = [0, 32], sizes = [8, 32], strides = [1, 1]} : vector<8x128xf32> to vector<8x32xf32>
    %88 = vector.extract_strided_slice %85 {offsets = [0, 64], sizes = [8, 32], strides = [1, 1]} : vector<8x128xf32> to vector<8x32xf32>
    %cst_30 = arith.constant 2.000000e+00 : f32
    %89 = vector.broadcast %cst_30 : f32 to vector<8x32xf32>
    %90 = arith.mulf %89, %88 : vector<8x32xf32>
    %cst_31 = arith.constant 1.000000e+00 : f32
    %91 = vector.broadcast %cst_31 : f32 to vector<8x32xf32>
    %92 = arith.subf %90, %91 : vector<8x32xf32>
    %93 = vector.extract_strided_slice %85 {offsets = [0, 96], sizes = [8, 32], strides = [1, 1]} : vector<8x128xf32> to vector<8x32xf32>
    %94 = arith.mulf %87, %53 : vector<8x32xf32>
    %95 = arith.mulf %86, %92 : vector<8x32xf32>
    %96 = arith.addf %94, %95 : vector<8x32xf32>
    %97 = math.tanh %96 : vector<8x32xf32>
    %98 = arith.mulf %93, %97 : vector<8x32xf32>
    %cst_32 = arith.constant dense<0.000000e+00> : vector<8x128xf32>
    %99 = tpu.matmul %98, %8, %cst_32 {dimension_numbers = #tpu.dot_dimension_numbers<[1], [0], [0], [1], [0, 0, 1, 1], [], []>} : vector<8x32xf32>, vector<32x128xf32>, vector<8x128xf32> -> vector<8x128xf32>
    %100 = arith.addf %99, %11 : vector<8x128xf32>
    %101 = vector.extract_strided_slice %5 {offsets = [16, 0], sizes = [8, 128], strides = [1, 1]} : vector<56x128xf32> to vector<8x128xf32>
    %cst_33 = arith.constant dense<0.000000e+00> : vector<8x128xf32>
    %102 = tpu.matmul %78, %6, %cst_33 {dimension_numbers = #tpu.dot_dimension_numbers<[1], [0], [0], [1], [0, 0, 1, 1], [], []>} : vector<8x32xf32>, vector<32x128xf32>, vector<8x128xf32> -> vector<8x128xf32>
    %103 = arith.addf %101, %102 : vector<8x128xf32>
    %104 = arith.negf %103 : vector<8x128xf32>
    %105 = math.exp %104 : vector<8x128xf32>
    %cst_34 = arith.constant 1.000000e+00 : f32
    %106 = vector.broadcast %cst_34 : f32 to vector<8x128xf32>
    %107 = arith.addf %106, %105 : vector<8x128xf32>
    %108 = arith.divf %106, %107 : vector<8x128xf32>
    %109 = vector.extract_strided_slice %108 {offsets = [0, 0], sizes = [8, 32], strides = [1, 1]} : vector<8x128xf32> to vector<8x32xf32>
    %110 = vector.extract_strided_slice %108 {offsets = [0, 32], sizes = [8, 32], strides = [1, 1]} : vector<8x128xf32> to vector<8x32xf32>
    %111 = vector.extract_strided_slice %108 {offsets = [0, 64], sizes = [8, 32], strides = [1, 1]} : vector<8x128xf32> to vector<8x32xf32>
    %cst_35 = arith.constant 2.000000e+00 : f32
    %112 = vector.broadcast %cst_35 : f32 to vector<8x32xf32>
    %113 = arith.mulf %112, %111 : vector<8x32xf32>
    %cst_36 = arith.constant 1.000000e+00 : f32
    %114 = vector.broadcast %cst_36 : f32 to vector<8x32xf32>
    %115 = arith.subf %113, %114 : vector<8x32xf32>
    %116 = vector.extract_strided_slice %108 {offsets = [0, 96], sizes = [8, 32], strides = [1, 1]} : vector<8x128xf32> to vector<8x32xf32>
    %117 = arith.mulf %110, %76 : vector<8x32xf32>
    %118 = arith.mulf %109, %115 : vector<8x32xf32>
    %119 = arith.addf %117, %118 : vector<8x32xf32>
    %120 = math.tanh %119 : vector<8x32xf32>
    %121 = arith.mulf %116, %120 : vector<8x32xf32>
    %cst_37 = arith.constant dense<0.000000e+00> : vector<8x128xf32>
    %122 = tpu.matmul %121, %7, %cst_37 {dimension_numbers = #tpu.dot_dimension_numbers<[1], [0], [0], [1], [0, 0, 1, 1], [], []>} : vector<8x32xf32>, vector<32x128xf32>, vector<8x128xf32> -> vector<8x128xf32>
    %123 = arith.addf %100, %122 : vector<8x128xf32>
    %124 = arith.negf %123 : vector<8x128xf32>
    %125 = math.exp %124 : vector<8x128xf32>
    %cst_38 = arith.constant 1.000000e+00 : f32
    %126 = vector.broadcast %cst_38 : f32 to vector<8x128xf32>
    %127 = arith.addf %126, %125 : vector<8x128xf32>
    %128 = arith.divf %126, %127 : vector<8x128xf32>
    %129 = vector.extract_strided_slice %128 {offsets = [0, 0], sizes = [8, 32], strides = [1, 1]} : vector<8x128xf32> to vector<8x32xf32>
    %130 = vector.extract_strided_slice %128 {offsets = [0, 32], sizes = [8, 32], strides = [1, 1]} : vector<8x128xf32> to vector<8x32xf32>
    %131 = vector.extract_strided_slice %128 {offsets = [0, 64], sizes = [8, 32], strides = [1, 1]} : vector<8x128xf32> to vector<8x32xf32>
    %cst_39 = arith.constant 2.000000e+00 : f32
    %132 = vector.broadcast %cst_39 : f32 to vector<8x32xf32>
    %133 = arith.mulf %132, %131 : vector<8x32xf32>
    %cst_40 = arith.constant 1.000000e+00 : f32
    %134 = vector.broadcast %cst_40 : f32 to vector<8x32xf32>
    %135 = arith.subf %133, %134 : vector<8x32xf32>
    %136 = vector.extract_strided_slice %128 {offsets = [0, 96], sizes = [8, 32], strides = [1, 1]} : vector<8x128xf32> to vector<8x32xf32>
    %137 = arith.mulf %130, %96 : vector<8x32xf32>
    %138 = arith.mulf %129, %135 : vector<8x32xf32>
    %139 = arith.addf %137, %138 : vector<8x32xf32>
    %140 = math.tanh %139 : vector<8x32xf32>
    %141 = arith.mulf %136, %140 : vector<8x32xf32>
    %cst_41 = arith.constant dense<0.000000e+00> : vector<8x128xf32>
    %142 = tpu.matmul %141, %8, %cst_41 {dimension_numbers = #tpu.dot_dimension_numbers<[1], [0], [0], [1], [0, 0, 1, 1], [], []>} : vector<8x32xf32>, vector<32x128xf32>, vector<8x128xf32> -> vector<8x128xf32>
    %143 = arith.addf %142, %11 : vector<8x128xf32>
    %144 = vector.extract_strided_slice %5 {offsets = [24, 0], sizes = [8, 128], strides = [1, 1]} : vector<56x128xf32> to vector<8x128xf32>
    %cst_42 = arith.constant dense<0.000000e+00> : vector<8x128xf32>
    %145 = tpu.matmul %121, %6, %cst_42 {dimension_numbers = #tpu.dot_dimension_numbers<[1], [0], [0], [1], [0, 0, 1, 1], [], []>} : vector<8x32xf32>, vector<32x128xf32>, vector<8x128xf32> -> vector<8x128xf32>
    %146 = arith.addf %144, %145 : vector<8x128xf32>
    %147 = arith.negf %146 : vector<8x128xf32>
    %148 = math.exp %147 : vector<8x128xf32>
    %cst_43 = arith.constant 1.000000e+00 : f32
    %149 = vector.broadcast %cst_43 : f32 to vector<8x128xf32>
    %150 = arith.addf %149, %148 : vector<8x128xf32>
    %151 = arith.divf %149, %150 : vector<8x128xf32>
    %152 = vector.extract_strided_slice %151 {offsets = [0, 0], sizes = [8, 32], strides = [1, 1]} : vector<8x128xf32> to vector<8x32xf32>
    %153 = vector.extract_strided_slice %151 {offsets = [0, 32], sizes = [8, 32], strides = [1, 1]} : vector<8x128xf32> to vector<8x32xf32>
    %154 = vector.extract_strided_slice %151 {offsets = [0, 64], sizes = [8, 32], strides = [1, 1]} : vector<8x128xf32> to vector<8x32xf32>
    %cst_44 = arith.constant 2.000000e+00 : f32
    %155 = vector.broadcast %cst_44 : f32 to vector<8x32xf32>
    %156 = arith.mulf %155, %154 : vector<8x32xf32>
    %cst_45 = arith.constant 1.000000e+00 : f32
    %157 = vector.broadcast %cst_45 : f32 to vector<8x32xf32>
    %158 = arith.subf %156, %157 : vector<8x32xf32>
    %159 = vector.extract_strided_slice %151 {offsets = [0, 96], sizes = [8, 32], strides = [1, 1]} : vector<8x128xf32> to vector<8x32xf32>
    %160 = arith.mulf %153, %119 : vector<8x32xf32>
    %161 = arith.mulf %152, %158 : vector<8x32xf32>
    %162 = arith.addf %160, %161 : vector<8x32xf32>
    %163 = math.tanh %162 : vector<8x32xf32>
    %164 = arith.mulf %159, %163 : vector<8x32xf32>
    %cst_46 = arith.constant dense<0.000000e+00> : vector<8x128xf32>
    %165 = tpu.matmul %164, %7, %cst_46 {dimension_numbers = #tpu.dot_dimension_numbers<[1], [0], [0], [1], [0, 0, 1, 1], [], []>} : vector<8x32xf32>, vector<32x128xf32>, vector<8x128xf32> -> vector<8x128xf32>
    %166 = arith.addf %143, %165 : vector<8x128xf32>
    %167 = arith.negf %166 : vector<8x128xf32>
    %168 = math.exp %167 : vector<8x128xf32>
    %cst_47 = arith.constant 1.000000e+00 : f32
    %169 = vector.broadcast %cst_47 : f32 to vector<8x128xf32>
    %170 = arith.addf %169, %168 : vector<8x128xf32>
    %171 = arith.divf %169, %170 : vector<8x128xf32>
    %172 = vector.extract_strided_slice %171 {offsets = [0, 0], sizes = [8, 32], strides = [1, 1]} : vector<8x128xf32> to vector<8x32xf32>
    %173 = vector.extract_strided_slice %171 {offsets = [0, 32], sizes = [8, 32], strides = [1, 1]} : vector<8x128xf32> to vector<8x32xf32>
    %174 = vector.extract_strided_slice %171 {offsets = [0, 64], sizes = [8, 32], strides = [1, 1]} : vector<8x128xf32> to vector<8x32xf32>
    %cst_48 = arith.constant 2.000000e+00 : f32
    %175 = vector.broadcast %cst_48 : f32 to vector<8x32xf32>
    %176 = arith.mulf %175, %174 : vector<8x32xf32>
    %cst_49 = arith.constant 1.000000e+00 : f32
    %177 = vector.broadcast %cst_49 : f32 to vector<8x32xf32>
    %178 = arith.subf %176, %177 : vector<8x32xf32>
    %179 = vector.extract_strided_slice %171 {offsets = [0, 96], sizes = [8, 32], strides = [1, 1]} : vector<8x128xf32> to vector<8x32xf32>
    %180 = arith.mulf %173, %139 : vector<8x32xf32>
    %181 = arith.mulf %172, %178 : vector<8x32xf32>
    %182 = arith.addf %180, %181 : vector<8x32xf32>
    %183 = math.tanh %182 : vector<8x32xf32>
    %184 = arith.mulf %179, %183 : vector<8x32xf32>
    %cst_50 = arith.constant dense<0.000000e+00> : vector<8x128xf32>
    %185 = tpu.matmul %184, %8, %cst_50 {dimension_numbers = #tpu.dot_dimension_numbers<[1], [0], [0], [1], [0, 0, 1, 1], [], []>} : vector<8x32xf32>, vector<32x128xf32>, vector<8x128xf32> -> vector<8x128xf32>
    %186 = arith.addf %185, %11 : vector<8x128xf32>
    %187 = vector.extract_strided_slice %5 {offsets = [32, 0], sizes = [8, 128], strides = [1, 1]} : vector<56x128xf32> to vector<8x128xf32>
    %cst_51 = arith.constant dense<0.000000e+00> : vector<8x128xf32>
    %188 = tpu.matmul %164, %6, %cst_51 {dimension_numbers = #tpu.dot_dimension_numbers<[1], [0], [0], [1], [0, 0, 1, 1], [], []>} : vector<8x32xf32>, vector<32x128xf32>, vector<8x128xf32> -> vector<8x128xf32>
    %189 = arith.addf %187, %188 : vector<8x128xf32>
    %190 = arith.negf %189 : vector<8x128xf32>
    %191 = math.exp %190 : vector<8x128xf32>
    %cst_52 = arith.constant 1.000000e+00 : f32
    %192 = vector.broadcast %cst_52 : f32 to vector<8x128xf32>
    %193 = arith.addf %192, %191 : vector<8x128xf32>
    %194 = arith.divf %192, %193 : vector<8x128xf32>
    %195 = vector.extract_strided_slice %194 {offsets = [0, 0], sizes = [8, 32], strides = [1, 1]} : vector<8x128xf32> to vector<8x32xf32>
    %196 = vector.extract_strided_slice %194 {offsets = [0, 32], sizes = [8, 32], strides = [1, 1]} : vector<8x128xf32> to vector<8x32xf32>
    %197 = vector.extract_strided_slice %194 {offsets = [0, 64], sizes = [8, 32], strides = [1, 1]} : vector<8x128xf32> to vector<8x32xf32>
    %cst_53 = arith.constant 2.000000e+00 : f32
    %198 = vector.broadcast %cst_53 : f32 to vector<8x32xf32>
    %199 = arith.mulf %198, %197 : vector<8x32xf32>
    %cst_54 = arith.constant 1.000000e+00 : f32
    %200 = vector.broadcast %cst_54 : f32 to vector<8x32xf32>
    %201 = arith.subf %199, %200 : vector<8x32xf32>
    %202 = vector.extract_strided_slice %194 {offsets = [0, 96], sizes = [8, 32], strides = [1, 1]} : vector<8x128xf32> to vector<8x32xf32>
    %203 = arith.mulf %196, %162 : vector<8x32xf32>
    %204 = arith.mulf %195, %201 : vector<8x32xf32>
    %205 = arith.addf %203, %204 : vector<8x32xf32>
    %206 = math.tanh %205 : vector<8x32xf32>
    %207 = arith.mulf %202, %206 : vector<8x32xf32>
    %cst_55 = arith.constant dense<0.000000e+00> : vector<8x128xf32>
    %208 = tpu.matmul %207, %7, %cst_55 {dimension_numbers = #tpu.dot_dimension_numbers<[1], [0], [0], [1], [0, 0, 1, 1], [], []>} : vector<8x32xf32>, vector<32x128xf32>, vector<8x128xf32> -> vector<8x128xf32>
    %209 = arith.addf %186, %208 : vector<8x128xf32>
    %210 = arith.negf %209 : vector<8x128xf32>
    %211 = math.exp %210 : vector<8x128xf32>
    %cst_56 = arith.constant 1.000000e+00 : f32
    %212 = vector.broadcast %cst_56 : f32 to vector<8x128xf32>
    %213 = arith.addf %212, %211 : vector<8x128xf32>
    %214 = arith.divf %212, %213 : vector<8x128xf32>
    %215 = vector.extract_strided_slice %214 {offsets = [0, 0], sizes = [8, 32], strides = [1, 1]} : vector<8x128xf32> to vector<8x32xf32>
    %216 = vector.extract_strided_slice %214 {offsets = [0, 32], sizes = [8, 32], strides = [1, 1]} : vector<8x128xf32> to vector<8x32xf32>
    %217 = vector.extract_strided_slice %214 {offsets = [0, 64], sizes = [8, 32], strides = [1, 1]} : vector<8x128xf32> to vector<8x32xf32>
    %cst_57 = arith.constant 2.000000e+00 : f32
    %218 = vector.broadcast %cst_57 : f32 to vector<8x32xf32>
    %219 = arith.mulf %218, %217 : vector<8x32xf32>
    %cst_58 = arith.constant 1.000000e+00 : f32
    %220 = vector.broadcast %cst_58 : f32 to vector<8x32xf32>
    %221 = arith.subf %219, %220 : vector<8x32xf32>
    %222 = vector.extract_strided_slice %214 {offsets = [0, 96], sizes = [8, 32], strides = [1, 1]} : vector<8x128xf32> to vector<8x32xf32>
    %223 = arith.mulf %216, %182 : vector<8x32xf32>
    %224 = arith.mulf %215, %221 : vector<8x32xf32>
    %225 = arith.addf %223, %224 : vector<8x32xf32>
    %226 = math.tanh %225 : vector<8x32xf32>
    %227 = arith.mulf %222, %226 : vector<8x32xf32>
    %cst_59 = arith.constant dense<0.000000e+00> : vector<8x128xf32>
    %228 = tpu.matmul %227, %8, %cst_59 {dimension_numbers = #tpu.dot_dimension_numbers<[1], [0], [0], [1], [0, 0, 1, 1], [], []>} : vector<8x32xf32>, vector<32x128xf32>, vector<8x128xf32> -> vector<8x128xf32>
    %229 = arith.addf %228, %11 : vector<8x128xf32>
    %230 = vector.extract_strided_slice %5 {offsets = [40, 0], sizes = [8, 128], strides = [1, 1]} : vector<56x128xf32> to vector<8x128xf32>
    %cst_60 = arith.constant dense<0.000000e+00> : vector<8x128xf32>
    %231 = tpu.matmul %207, %6, %cst_60 {dimension_numbers = #tpu.dot_dimension_numbers<[1], [0], [0], [1], [0, 0, 1, 1], [], []>} : vector<8x32xf32>, vector<32x128xf32>, vector<8x128xf32> -> vector<8x128xf32>
    %232 = arith.addf %230, %231 : vector<8x128xf32>
    %233 = arith.negf %232 : vector<8x128xf32>
    %234 = math.exp %233 : vector<8x128xf32>
    %cst_61 = arith.constant 1.000000e+00 : f32
    %235 = vector.broadcast %cst_61 : f32 to vector<8x128xf32>
    %236 = arith.addf %235, %234 : vector<8x128xf32>
    %237 = arith.divf %235, %236 : vector<8x128xf32>
    %238 = vector.extract_strided_slice %237 {offsets = [0, 0], sizes = [8, 32], strides = [1, 1]} : vector<8x128xf32> to vector<8x32xf32>
    %239 = vector.extract_strided_slice %237 {offsets = [0, 32], sizes = [8, 32], strides = [1, 1]} : vector<8x128xf32> to vector<8x32xf32>
    %240 = vector.extract_strided_slice %237 {offsets = [0, 64], sizes = [8, 32], strides = [1, 1]} : vector<8x128xf32> to vector<8x32xf32>
    %cst_62 = arith.constant 2.000000e+00 : f32
    %241 = vector.broadcast %cst_62 : f32 to vector<8x32xf32>
    %242 = arith.mulf %241, %240 : vector<8x32xf32>
    %cst_63 = arith.constant 1.000000e+00 : f32
    %243 = vector.broadcast %cst_63 : f32 to vector<8x32xf32>
    %244 = arith.subf %242, %243 : vector<8x32xf32>
    %245 = vector.extract_strided_slice %237 {offsets = [0, 96], sizes = [8, 32], strides = [1, 1]} : vector<8x128xf32> to vector<8x32xf32>
    %246 = arith.mulf %239, %205 : vector<8x32xf32>
    %247 = arith.mulf %238, %244 : vector<8x32xf32>
    %248 = arith.addf %246, %247 : vector<8x32xf32>
    %249 = math.tanh %248 : vector<8x32xf32>
    %250 = arith.mulf %245, %249 : vector<8x32xf32>
    %cst_64 = arith.constant dense<0.000000e+00> : vector<8x128xf32>
    %251 = tpu.matmul %250, %7, %cst_64 {dimension_numbers = #tpu.dot_dimension_numbers<[1], [0], [0], [1], [0, 0, 1, 1], [], []>} : vector<8x32xf32>, vector<32x128xf32>, vector<8x128xf32> -> vector<8x128xf32>
    %252 = arith.addf %229, %251 : vector<8x128xf32>
    %253 = arith.negf %252 : vector<8x128xf32>
    %254 = math.exp %253 : vector<8x128xf32>
    %cst_65 = arith.constant 1.000000e+00 : f32
    %255 = vector.broadcast %cst_65 : f32 to vector<8x128xf32>
    %256 = arith.addf %255, %254 : vector<8x128xf32>
    %257 = arith.divf %255, %256 : vector<8x128xf32>
    %258 = vector.extract_strided_slice %257 {offsets = [0, 0], sizes = [8, 32], strides = [1, 1]} : vector<8x128xf32> to vector<8x32xf32>
    %259 = vector.extract_strided_slice %257 {offsets = [0, 32], sizes = [8, 32], strides = [1, 1]} : vector<8x128xf32> to vector<8x32xf32>
    %260 = vector.extract_strided_slice %257 {offsets = [0, 64], sizes = [8, 32], strides = [1, 1]} : vector<8x128xf32> to vector<8x32xf32>
    %cst_66 = arith.constant 2.000000e+00 : f32
    %261 = vector.broadcast %cst_66 : f32 to vector<8x32xf32>
    %262 = arith.mulf %261, %260 : vector<8x32xf32>
    %cst_67 = arith.constant 1.000000e+00 : f32
    %263 = vector.broadcast %cst_67 : f32 to vector<8x32xf32>
    %264 = arith.subf %262, %263 : vector<8x32xf32>
    %265 = vector.extract_strided_slice %257 {offsets = [0, 96], sizes = [8, 32], strides = [1, 1]} : vector<8x128xf32> to vector<8x32xf32>
    %266 = arith.mulf %259, %225 : vector<8x32xf32>
    %267 = arith.mulf %258, %264 : vector<8x32xf32>
    %268 = arith.addf %266, %267 : vector<8x32xf32>
    %269 = math.tanh %268 : vector<8x32xf32>
    %270 = arith.mulf %265, %269 : vector<8x32xf32>
    %cst_68 = arith.constant dense<0.000000e+00> : vector<8x128xf32>
    %271 = tpu.matmul %270, %8, %cst_68 {dimension_numbers = #tpu.dot_dimension_numbers<[1], [0], [0], [1], [0, 0, 1, 1], [], []>} : vector<8x32xf32>, vector<32x128xf32>, vector<8x128xf32> -> vector<8x128xf32>
    %272 = arith.addf %271, %11 : vector<8x128xf32>
    %273 = vector.extract_strided_slice %5 {offsets = [48, 0], sizes = [8, 128], strides = [1, 1]} : vector<56x128xf32> to vector<8x128xf32>
    %cst_69 = arith.constant dense<0.000000e+00> : vector<8x128xf32>
    %274 = tpu.matmul %250, %6, %cst_69 {dimension_numbers = #tpu.dot_dimension_numbers<[1], [0], [0], [1], [0, 0, 1, 1], [], []>} : vector<8x32xf32>, vector<32x128xf32>, vector<8x128xf32> -> vector<8x128xf32>
    %275 = arith.addf %273, %274 : vector<8x128xf32>
    %276 = arith.negf %275 : vector<8x128xf32>
    %277 = math.exp %276 : vector<8x128xf32>
    %cst_70 = arith.constant 1.000000e+00 : f32
    %278 = vector.broadcast %cst_70 : f32 to vector<8x128xf32>
    %279 = arith.addf %278, %277 : vector<8x128xf32>
    %280 = arith.divf %278, %279 : vector<8x128xf32>
    %281 = vector.extract_strided_slice %280 {offsets = [0, 0], sizes = [8, 32], strides = [1, 1]} : vector<8x128xf32> to vector<8x32xf32>
    %282 = vector.extract_strided_slice %280 {offsets = [0, 32], sizes = [8, 32], strides = [1, 1]} : vector<8x128xf32> to vector<8x32xf32>
    %283 = vector.extract_strided_slice %280 {offsets = [0, 64], sizes = [8, 32], strides = [1, 1]} : vector<8x128xf32> to vector<8x32xf32>
    %cst_71 = arith.constant 2.000000e+00 : f32
    %284 = vector.broadcast %cst_71 : f32 to vector<8x32xf32>
    %285 = arith.mulf %284, %283 : vector<8x32xf32>
    %cst_72 = arith.constant 1.000000e+00 : f32
    %286 = vector.broadcast %cst_72 : f32 to vector<8x32xf32>
    %287 = arith.subf %285, %286 : vector<8x32xf32>
    %288 = vector.extract_strided_slice %280 {offsets = [0, 96], sizes = [8, 32], strides = [1, 1]} : vector<8x128xf32> to vector<8x32xf32>
    %289 = arith.mulf %282, %248 : vector<8x32xf32>
    %290 = arith.mulf %281, %287 : vector<8x32xf32>
    %291 = arith.addf %289, %290 : vector<8x32xf32>
    %292 = math.tanh %291 : vector<8x32xf32>
    %293 = arith.mulf %288, %292 : vector<8x32xf32>
    %cst_73 = arith.constant dense<0.000000e+00> : vector<8x128xf32>
    %294 = tpu.matmul %293, %7, %cst_73 {dimension_numbers = #tpu.dot_dimension_numbers<[1], [0], [0], [1], [0, 0, 1, 1], [], []>} : vector<8x32xf32>, vector<32x128xf32>, vector<8x128xf32> -> vector<8x128xf32>
    %295 = arith.addf %272, %294 : vector<8x128xf32>
    %296 = arith.negf %295 : vector<8x128xf32>
    %297 = math.exp %296 : vector<8x128xf32>
    %cst_74 = arith.constant 1.000000e+00 : f32
    %298 = vector.broadcast %cst_74 : f32 to vector<8x128xf32>
    %299 = arith.addf %298, %297 : vector<8x128xf32>
    %300 = arith.divf %298, %299 : vector<8x128xf32>
    %301 = vector.extract_strided_slice %300 {offsets = [0, 0], sizes = [8, 32], strides = [1, 1]} : vector<8x128xf32> to vector<8x32xf32>
    %302 = vector.extract_strided_slice %300 {offsets = [0, 32], sizes = [8, 32], strides = [1, 1]} : vector<8x128xf32> to vector<8x32xf32>
    %303 = vector.extract_strided_slice %300 {offsets = [0, 64], sizes = [8, 32], strides = [1, 1]} : vector<8x128xf32> to vector<8x32xf32>
    %cst_75 = arith.constant 2.000000e+00 : f32
    %304 = vector.broadcast %cst_75 : f32 to vector<8x32xf32>
    %305 = arith.mulf %304, %303 : vector<8x32xf32>
    %cst_76 = arith.constant 1.000000e+00 : f32
    %306 = vector.broadcast %cst_76 : f32 to vector<8x32xf32>
    %307 = arith.subf %305, %306 : vector<8x32xf32>
    %308 = vector.extract_strided_slice %300 {offsets = [0, 96], sizes = [8, 32], strides = [1, 1]} : vector<8x128xf32> to vector<8x32xf32>
    %309 = arith.mulf %302, %268 : vector<8x32xf32>
    %310 = arith.mulf %301, %307 : vector<8x32xf32>
    %311 = arith.addf %309, %310 : vector<8x32xf32>
    %312 = math.tanh %311 : vector<8x32xf32>
    %313 = arith.mulf %308, %312 : vector<8x32xf32>
    %c0_77 = arith.constant 0 : index
    %c0_78 = arith.constant 0 : index
    %314 = vector.load %arg7[%c0_77, %c0_78] : memref<32x128xf32, #tpu.memory_space<vmem>>, vector<32x128xf32>
    %cst_79 = arith.constant dense<0.000000e+00> : vector<8x128xf32>
    %315 = tpu.matmul %313, %314, %cst_79 {dimension_numbers = #tpu.dot_dimension_numbers<[1], [0], [0], [1], [0, 0, 1, 1], [], []>} : vector<8x32xf32>, vector<32x128xf32>, vector<8x128xf32> -> vector<8x128xf32>
    %c0_80 = arith.constant 0 : index
    %c0_81 = arith.constant 0 : index
    %316 = vector.load %arg8[%c0_80, %c0_81] : memref<1x128xf32, #tpu.memory_space<vmem>>, vector<1x128xf32>
    %317 = vector.broadcast %316 : vector<1x128xf32> to vector<8x128xf32>
    %318 = arith.addf %315, %317 : vector<8x128xf32>
    %c0_82 = arith.constant 0 : index
    %c0_83 = arith.constant 0 : index
    %319 = vector.load %arg9[%c0_82, %c0_83] : memref<8x128xf32, #tpu.memory_space<vmem>>, vector<8x128xf32>
    tpu.vector_store %arg9[%c0_82, %c0_83], %318 {strides = array<i32>} : memref<8x128xf32, #tpu.memory_space<vmem>>, vector<8x128xf32>,
    return
  }
}

</mosaic_0001>

<llo_original>
// kernel: lstm_forward.1
$region0: #{lstm_forward.1}
  #allocation0 [shape = 'u32[]', space=smem, size = 0x4, offset = 0x4, fixed_abs, tag = 'smem constant byte address 0x4 - core index']
  #allocation1 [shape = 'u32[144,128]{1,0:T(1,128)}', space=vmem, size = 0x12000, scoped, tag = 'internal scratch']
  %s0 = inlined_call_operand.vmem [shape: f32[56,4], index: 0, kind: input, shape index: {}]
  %s1 = inlined_call_operand.vmem [shape: f32[4,128], index: 1, kind: input, shape index: {}]
  %s2 = inlined_call_operand.vmem [shape: f32[32,128], index: 2, kind: input, shape index: {}]
  %s3 = inlined_call_operand.vmem [shape: f32[1,128], index: 3, kind: input, shape index: {}]
  %s4 = inlined_call_operand.vmem [shape: f32[32,128], index: 4, kind: input, shape index: {}]
  %s5 = inlined_call_operand.vmem [shape: f32[32,128], index: 5, kind: input, shape index: {}]
  %s6 = inlined_call_operand.hbm [shape: f32[1,128], index: 6, kind: input, shape index: {}]
  %s7 = inlined_call_operand.vmem [shape: f32[32,128], index: 7, kind: input, shape index: {}]
  %s8 = inlined_call_operand.vmem [shape: f32[1,128], index: 8, kind: input, shape index: {}]
  %s9 = inlined_call_operand.vmem [shape: f32[8,128], index: 9, kind: output, shape index: {}]
  %s10 = sld [smem:[#allocation0]]
  $region50: #{lstm_forward.1} parent=0
    _
  %s12 = ssub.s32 1, %s10
  %s13 = scalar_select 0, %s12, %s10
  $region1: #{lstm_forward.1} parent=0
    #allocation2 [shape = 'u8[512]{0}', space=vmem, size = 0x400, scoped, tag = 'input window, operand 6, single buffered']
    #allocation3 [shape = 's32[1]{0}', space=sflag, size = 0x4, scoped, tag = 'scoped memory for lstm_forward.1']
    %14 = vsyncpa [#allocation3], 0
    // Predicated region
    $region2: #{lstm_forward.1} parent=1 // pred_check
      _
    $region3: #{lstm_forward.1} parent=1 // pred_check_branch
      %16 = sbr.rel (0) target = $region5
    $region4: #{lstm_forward.1} parent=1 // pred_region
      _
    $region5: #{lstm_forward.1} parent=1 // pred_fallthru
      _
    // Predicated region
    $region6: #{lstm_forward.1} parent=1 // pred_check
      _
    $region7: #{lstm_forward.1} parent=1 // pred_check_branch
      %18 = sbr.rel (0) target = $region9
    $region8: #{lstm_forward.1} parent=1 // pred_region
      _
    $region9: #{lstm_forward.1} parent=1 // pred_fallthru
      _
    // Predicated region
    $region10: #{lstm_forward.1} parent=1 // pred_check
      _
    $region11: #{lstm_forward.1} parent=1 // pred_check_branch
      %20 = sbr.rel (0) target = $region13
    $region12: #{lstm_forward.1} parent=1 // pred_region
      _
    $region13: #{lstm_forward.1} parent=1 // pred_fallthru
      _
    // Predicated region
    $region14: #{lstm_forward.1} parent=1 // pred_check
      _
    $region15: #{lstm_forward.1} parent=1 // pred_check_branch
      %22 = sbr.rel (0) target = $region17
    $region16: #{lstm_forward.1} parent=1 // pred_region
      _
    $region17: #{lstm_forward.1} parent=1 // pred_fallthru
      _
    // Predicated region
    $region18: #{lstm_forward.1} parent=1 // pred_check
      _
    $region19: #{lstm_forward.1} parent=1 // pred_check_branch
      %24 = sbr.rel (0) target = $region21
    $region20: #{lstm_forward.1} parent=1 // pred_region
      _
    $region21: #{lstm_forward.1} parent=1 // pred_fallthru
      _
    // Predicated region
    $region22: #{lstm_forward.1} parent=1 // pred_check
      _
    $region23: #{lstm_forward.1} parent=1 // pred_check_branch
      %26 = sbr.rel (0) target = $region25
    $region24: #{lstm_forward.1} parent=1 // pred_region
      _
    $region25: #{lstm_forward.1} parent=1 // pred_fallthru
      _
    // Predicated region
    $region26: #{lstm_forward.1} parent=1 // pred_check
      _
    $region27: #{lstm_forward.1} parent=1 // pred_check_branch
      %28 = sbr.rel (0) target = $region29
    $region28: #{lstm_forward.1} parent=1 // pred_region
      %s30 = ssub.s32 16, 16
      %31 = vsyncadd [#allocation3], %s30
      %s33 = sshll.u32 [#allocation2], 4
      %s34 = int_to_ptr.vmem [resolvable:$true] %s33
      %36 = dma.hbm_to_vmem [thread:$0]  %s6, 16, %s34, [#allocation3]
    $region29: #{lstm_forward.1} parent=1 // pred_fallthru
      _
    // Predicated region
    $region30: #{lstm_forward.1} parent=1 // pred_check
      _
    $region31: #{lstm_forward.1} parent=1 // pred_check_branch
      %38 = sbr.rel (0) target = $region33
    $region32: #{lstm_forward.1} parent=1 // pred_region
      _
    $region33: #{lstm_forward.1} parent=1 // pred_fallthru
      _
    // Predicated region
    $region34: #{lstm_forward.1} parent=1 // pred_check
      _
    $region35: #{lstm_forward.1} parent=1 // pred_check_branch
      %40 = sbr.rel (0) target = $region37
    $region36: #{lstm_forward.1} parent=1 // pred_region
      _
    $region37: #{lstm_forward.1} parent=1 // pred_fallthru
      _
    // Predicated region
    $region38: #{lstm_forward.1} parent=1 // pred_check
      _
    $region39: #{lstm_forward.1} parent=1 // pred_check_branch
      %42 = sbr.rel (0) target = $region41
    $region40: #{lstm_forward.1} parent=1 // pred_region
      %43 = dma.done [#allocation3], 16
    $region41: #{lstm_forward.1} parent=1 // pred_fallthru
      _
    %v44 = vld [vmem:[%s0] sm:$0xff]
    %v45 = vld [vmem:[%s0 + $0x8] sm:$0xff]
    %v46 = vld [vmem:[%s0 + $0x10] sm:$0xff]
    %v47 = vld [vmem:[%s0 + $0x18] sm:$0xff]
    %v48 = vld [vmem:[%s0 + $0x20] sm:$0xff]
    %v49 = vld [vmem:[%s0 + $0x28] sm:$0xff]
    %v50 = vld [vmem:[%s0 + $0x30] sm:$0xff]
    %v51 = vld [vmem:[%s1] sm:$0xf]
    %v52 = vld [vmem:[%s3] sm:$0x1]
    %v54 = vlaneseq
    %v55 = vshrl.u32 %v54, 7
    %v56 = vsub.s32 0, %v55
    %v57 = vrot.slane %v52, %v56
    %vm59 = vcmask 31744
    %v61 = vsel %vm59, %v44, 0
    %v64 = vsel %vm59, %v45, 0
    %v67 = vsel %vm59, %v46, 0
    %v70 = vsel %vm59, %v47, 0
    %v73 = vsel %vm59, %v48, 0
    %v76 = vsel %vm59, %v49, 0
    %v79 = vsel %vm59, %v50, 0
    %vm81 = vcmask 1043456
    %v83 = vsel %vm81, %v51, 0
    %85 = vmatprep.subr.mxu0 0.0
    %86 = vmatpush1.msra.mxu0 0.0
    %87 = vmatprep.subr.mxu0 0.0
    %88 = vmatpush1.msra.mxu0 0.0
    %89 = vmatprep.subr.mxu0 0.0
    %90 = vmatpush1.msra.mxu0 0.0
    %91 = vmatprep.subr.mxu0 0.0
    %92 = vmatpush1.msra.mxu0 0.0
    %93 = vmatprep.subr.mxu0 0.0
    %94 = vmatpush1.msra.mxu0 0.0
    %95 = vmatprep.subr.mxu0 0.0
    %96 = vmatpush1.msra.mxu0 0.0
    %97 = vmatprep.subr.mxu0 0.0
    %98 = vmatpush1.msra.mxu0 0.0
    %99 = vmatprep.subr.mxu0 0.0
    %100 = vmatpush1.msra.mxu0 0.0
    %101 = vmatprep.subr.mxu0 0.0
    %102 = vmatpush1.msra.mxu0 0.0
    %103 = vmatprep.subr.mxu0 0.0
    %104 = vmatpush1.msra.mxu0 0.0
    %105 = vmatprep.subr.mxu0 0.0
    %106 = vmatpush1.msra.mxu0 0.0
    %107 = vmatprep.subr.mxu0 0.0
    %108 = vmatpush1.msra.mxu0 0.0
    %109 = vmatprep.subr.mxu0 0.0
    %110 = vmatpush1.msra.mxu0 0.0
    %111 = vmatprep.subr.mxu0 0.0
    %112 = vmatpush1.msra.mxu0 0.0
    %113 = vmatprep.subr.mxu0 0.0
    %114 = vmatpush1.msra.mxu0 0.0
    %115 = vmatprep.subr.mxu0 0.0
    %116 = vmatpush1.msra.mxu0 %v83
    %117 = vmatprep.subr.mxu0 0.0
    %118 = vmatpush2.msra.mxu0 0.0
    %119 = vmatprep.subr.mxu0 0.0
    %120 = vmatpush2.msra.mxu0 0.0
    %121 = vmatprep.subr.mxu0 0.0
    %122 = vmatpush2.msra.mxu0 0.0
    %123 = vmatprep.subr.mxu0 0.0
    %124 = vmatpush2.msra.mxu0 0.0
    %125 = vmatprep.subr.mxu0 0.0
    %126 = vmatpush2.msra.mxu0 0.0
    %127 = vmatprep.subr.mxu0 0.0
    %128 = vmatpush2.msra.mxu0 0.0
    %129 = vmatprep.subr.mxu0 0.0
    %130 = vmatpush2.msra.mxu0 0.0
    %131 = vmatprep.subr.mxu0 0.0
    %132 = vmatpush2.msra.mxu0 0.0
    %133 = vmatprep.subr.mxu0 0.0
    %134 = vmatpush2.msra.mxu0 0.0
    %135 = vmatprep.subr.mxu0 0.0
    %136 = vmatpush2.msra.mxu0 0.0
    %137 = vmatprep.subr.mxu0 0.0
    %138 = vmatpush2.msra.mxu0 0.0
    %139 = vmatprep.subr.mxu0 0.0
    %140 = vmatpush2.msra.mxu0 0.0
    %141 = vmatprep.subr.mxu0 0.0
    %142 = vmatpush2.msra.mxu0 0.0
    %143 = vmatprep.subr.mxu0 0.0
    %144 = vmatpush2.msra.mxu0 0.0
    %145 = vmatprep.subr.mxu0 0.0
    %146 = vmatpush2.msra.mxu0 0.0
    %147 = vmatprep.subr.mxu0 0.0
    %148 = vmatpush2.msra.mxu0 0.0
    %149 = vmatprep.mubr.f32.mxu0 0.0
    %150 = vmatmul.mubr.f32.gmra.mxu0 %v61
    %v151 = vpop.f32.mrf.mxu0
    %v152 = vadd.f32 %v57, %v151
    %v153 = vpop.f32.mrf.mxu0
    %154 = vmatprep.mubr.f32.mxu0 0.0
    %155 = vmatmul.mubr.f32.gmra.mxu0 %v64
    %v156 = vpop.f32.mrf.mxu0
    %v157 = vadd.f32 %v57, %v156
    %v158 = vpop.f32.mrf.mxu0
    %159 = vmatprep.mubr.f32.mxu0 0.0
    %160 = vmatmul.mubr.f32.gmra.mxu0 %v67
    %v161 = vpop.f32.mrf.mxu0
    %v162 = vadd.f32 %v57, %v161
    %v163 = vpop.f32.mrf.mxu0
    %164 = vmatprep.mubr.f32.mxu0 0.0
    %165 = vmatmul.mubr.f32.gmra.mxu0 %v70
    %v166 = vpop.f32.mrf.mxu0
    %v167 = vadd.f32 %v57, %v166
    %v168 = vpop.f32.mrf.mxu0
    %169 = vmatprep.mubr.f32.mxu0 0.0
    %170 = vmatmul.mubr.f32.gmra.mxu0 %v73
    %v171 = vpop.f32.mrf.mxu0
    %v172 = vadd.f32 %v57, %v171
    %v173 = vpop.f32.mrf.mxu0
    %174 = vmatprep.mubr.f32.mxu0 0.0
    %175 = vmatmul.mubr.f32.gmra.mxu0 %v76
    %v176 = vpop.f32.mrf.mxu0
    %v177 = vadd.f32 %v57, %v176
    %v178 = vpop.f32.mrf.mxu0
    %179 = vmatprep.mubr.f32.mxu0 0.0
    %180 = vmatmul.mubr.f32.gmra.mxu0 %v79
    %v181 = vpop.f32.mrf.mxu0
    %v182 = vadd.f32 %v57, %v181
    %v183 = vpop.f32.mrf.mxu0
    %184 = vdwg.mxu0
    %v185 = vld [vmem:[%s2] sm:$0xff]
    %v186 = vld [vmem:[%s2 + $0x8] sm:$0xff]
    %v187 = vld [vmem:[%s2 + $0x10] sm:$0xff]
    %v188 = vld [vmem:[%s2 + $0x18] sm:$0xff]
    %v189 = vld [vmem:[%s4] sm:$0xff]
    %v190 = vld [vmem:[%s4 + $0x8] sm:$0xff]
    %v191 = vld [vmem:[%s4 + $0x10] sm:$0xff]
    %v192 = vld [vmem:[%s4 + $0x18] sm:$0xff]
    %v193 = vld [vmem:[%s5] sm:$0xff]
    %v194 = vld [vmem:[%s5 + $0x8] sm:$0xff]
    %v195 = vld [vmem:[%s5 + $0x10] sm:$0xff]
    %v196 = vld [vmem:[%s5 + $0x18] sm:$0xff]
    %v197 = vld [vmem:[#allocation2] sm:$0x1]
    %v199 = vlaneseq
    %v200 = vshrl.u32 %v199, 7
    %v201 = vsub.s32 0, %v200
    %v202 = vrot.slane %v197, %v201
    %vm204 = vcmask 261120
    %v206 = vsel %vm204, 0.0, 0
    %208 = vmatprep.subr.mxu0 0.0
    %209 = vmatpush1.msra.mxu0 0.0
    %210 = vmatprep.subr.mxu0 0.0
    %211 = vmatpush1.msra.mxu0 0.0
    %212 = vmatprep.subr.mxu0 0.0
    %213 = vmatpush1.msra.mxu0 0.0
    %214 = vmatprep.subr.mxu0 0.0
    %215 = vmatpush1.msra.mxu0 0.0
    %216 = vmatprep.subr.mxu0 0.0
    %217 = vmatpush1.msra.mxu0 0.0
    %218 = vmatprep.subr.mxu0 0.0
    %219 = vmatpush1.msra.mxu0 0.0
    %220 = vmatprep.subr.mxu0 0.0
    %221 = vmatpush1.msra.mxu0 0.0
    %222 = vmatprep.subr.mxu0 0.0
    %223 = vmatpush1.msra.mxu0 0.0
    %224 = vmatprep.subr.mxu0 0.0
    %225 = vmatpush1.msra.mxu0 0.0
    %226 = vmatprep.subr.mxu0 0.0
    %227 = vmatpush1.msra.mxu0 0.0
    %228 = vmatprep.subr.mxu0 0.0
    %229 = vmatpush1.msra.mxu0 0.0
    %230 = vmatprep.subr.mxu0 0.0
    %231 = vmatpush1.msra.mxu0 0.0
    %232 = vmatprep.subr.mxu0 0.0
    %233 = vmatpush1.msra.mxu0 %v196
    %234 = vmatprep.subr.mxu0 0.0
    %235 = vmatpush1.msra.mxu0 %v195
    %236 = vmatprep.subr.mxu0 0.0
    %237 = vmatpush1.msra.mxu0 %v194
    %238 = vmatprep.subr.mxu0 0.0
    %239 = vmatpush1.msra.mxu0 %v193
    %240 = vmatprep.subr.mxu0 0.0
    %241 = vmatpush2.msra.mxu0 0.0
    %242 = vmatprep.subr.mxu0 0.0
    %243 = vmatpush2.msra.mxu0 0.0
    %244 = vmatprep.subr.mxu0 0.0
    %245 = vmatpush2.msra.mxu0 0.0
    %246 = vmatprep.subr.mxu0 0.0
    %247 = vmatpush2.msra.mxu0 0.0
    %248 = vmatprep.subr.mxu0 0.0
    %249 = vmatpush2.msra.mxu0 0.0
    %250 = vmatprep.subr.mxu0 0.0
    %251 = vmatpush2.msra.mxu0 0.0
    %252 = vmatprep.subr.mxu0 0.0
    %253 = vmatpush2.msra.mxu0 0.0
    %254 = vmatprep.subr.mxu0 0.0
    %255 = vmatpush2.msra.mxu0 0.0
    %256 = vmatprep.subr.mxu0 0.0
    %257 = vmatpush2.msra.mxu0 0.0
    %258 = vmatprep.subr.mxu0 0.0
    %259 = vmatpush2.msra.mxu0 0.0
    %260 = vmatprep.subr.mxu0 0.0
    %261 = vmatpush2.msra.mxu0 0.0
    %262 = vmatprep.subr.mxu0 0.0
    %263 = vmatpush2.msra.mxu0 0.0
    %264 = vmatprep.subr.mxu0 0.0
    %265 = vmatpush2.msra.mxu0 0.0
    %266 = vmatprep.subr.mxu0 0.0
    %267 = vmatpush2.msra.mxu0 0.0
    %268 = vmatprep.subr.mxu0 0.0
    %269 = vmatpush2.msra.mxu0 0.0
    %270 = vmatprep.subr.mxu0 0.0
    %271 = vmatpush2.msra.mxu0 0.0
    %272 = vmatprep.mubr.f32.mxu0 0.0
    %273 = vmatmul.mubr.f32.gmra.mxu0 %v206
    %v274 = vpop.f32.mrf.mxu0
    %v275 = vadd.f32 %v202, %v274
    %v276 = vpop.f32.mrf.mxu0
    %277 = vdwg.mxu0
    %278 = vmatprep.subr.mxu0 0.0
    %279 = vmatpush1.msra.mxu0 0.0
    %280 = vmatprep.subr.mxu0 0.0
    %281 = vmatpush1.msra.mxu0 0.0
    %282 = vmatprep.subr.mxu0 0.0
    %283 = vmatpush1.msra.mxu0 0.0
    %284 = vmatprep.subr.mxu0 0.0
    %285 = vmatpush1.msra.mxu0 0.0
    %286 = vmatprep.subr.mxu0 0.0
    %287 = vmatpush1.msra.mxu0 0.0
    %288 = vmatprep.subr.mxu0 0.0
    %289 = vmatpush1.msra.mxu0 0.0
    %290 = vmatprep.subr.mxu0 0.0
    %291 = vmatpush1.msra.mxu0 0.0
    %292 = vmatprep.subr.mxu0 0.0
    %293 = vmatpush1.msra.mxu0 0.0
    %294 = vmatprep.subr.mxu0 0.0
    %295 = vmatpush1.msra.mxu0 0.0
    %296 = vmatprep.subr.mxu0 0.0
    %297 = vmatpush1.msra.mxu0 0.0
    %298 = vmatprep.subr.mxu0 0.0
    %299 = vmatpush1.msra.mxu0 0.0
    %300 = vmatprep.subr.mxu0 0.0
    %301 = vmatpush1.msra.mxu0 0.0
    %302 = vmatprep.subr.mxu0 0.0
    %303 = vmatpush1.msra.mxu0 %v188
    %304 = vmatprep.subr.mxu0 0.0
    %305 = vmatpush1.msra.mxu0 %v187
    %306 = vmatprep.subr.mxu0 0.0
    %307 = vmatpush1.msra.mxu0 %v186
    %308 = vmatprep.subr.mxu0 0.0
    %309 = vmatpush1.msra.mxu0 %v185
    %310 = vmatprep.subr.mxu0 0.0
    %311 = vmatpush2.msra.mxu0 0.0
    %312 = vmatprep.subr.mxu0 0.0
    %313 = vmatpush2.msra.mxu0 0.0
    %314 = vmatprep.subr.mxu0 0.0
    %315 = vmatpush2.msra.mxu0 0.0
    %316 = vmatprep.subr.mxu0 0.0
    %317 = vmatpush2.msra.mxu0 0.0
    %318 = vmatprep.subr.mxu0 0.0
    %319 = vmatpush2.msra.mxu0 0.0
    %320 = vmatprep.subr.mxu0 0.0
    %321 = vmatpush2.msra.mxu0 0.0
    %322 = vmatprep.subr.mxu0 0.0
    %323 = vmatpush2.msra.mxu0 0.0
    %324 = vmatprep.subr.mxu0 0.0
    %325 = vmatpush2.msra.mxu0 0.0
    %326 = vmatprep.subr.mxu0 0.0
    %327 = vmatpush2.msra.mxu0 0.0
    %328 = vmatprep.subr.mxu0 0.0
    %329 = vmatpush2.msra.mxu0 0.0
    %330 = vmatprep.subr.mxu0 0.0
    %331 = vmatpush2.msra.mxu0 0.0
    %332 = vmatprep.subr.mxu0 0.0
    %333 = vmatpush2.msra.mxu0 0.0
    %334 = vmatprep.subr.mxu0 0.0
    %335 = vmatpush2.msra.mxu0 0.0
    %336 = vmatprep.subr.mxu0 0.0
    %337 = vmatpush2.msra.mxu0 0.0
    %338 = vmatprep.subr.mxu0 0.0
    %339 = vmatpush2.msra.mxu0 0.0
    %340 = vmatprep.subr.mxu0 0.0
    %341 = vmatpush2.msra.mxu0 0.0
    %342 = vmatprep.mubr.f32.mxu0 0.0
    %343 = vmatmul.mubr.f32.gmra.mxu0 %v206
    %v344 = vpop.f32.mrf.mxu0
    %v345 = vadd.f32 0.0, %v344
    %v346 = vpop.f32.mrf.mxu0
    %347 = vdwg.mxu0
    %v348 = vadd.f32 %v152, %v345
    %v349 = vxor.u32 %v348, 2147483648
    %v350 = vmul.f32 %v349, 1.442695
    %v351 = vpow.pop %v350
    %v352 = vadd.f32 %v351, 1.0
    %v353 = vrcp.pop %v352
    %v354 = vmul.f32 1.0, %v353
    %v355 = vmul.f32 %v354, 2.0
    %v356 = vsub.f32 %v355, 1.0
    %v357 = vmul.f32 %v354, 0.0
    %359 = vrot.lane.b32.xlu0 %v356, 64
    %v360 = vpop.permute.xlu0 %359
    %v362 = vmul.f32 %v354, %v360
    %364 = vrot.lane.b32.xlu0 %v362, 32
    %v365 = vpop.permute.xlu0 %364
    %v367 = vadd.f32 %v357, %v365
    %v368 = vtanh.pop %v367
    %370 = vrot.lane.b32.xlu0 %v368, 64
    %v371 = vpop.permute.xlu0 %370
    %v373 = vmul.f32 %v354, %v371
    %375 = vrot.lane.b32.xlu0 %v373, 32
    %v376 = vpop.permute.xlu0 %375
    %v377 = vsel %vm204, %v376, 0
    %379 = vmatprep.subr.mxu0 0.0
    %380 = vmatpush1.msra.mxu0 0.0
    %381 = vmatprep.subr.mxu0 0.0
    %382 = vmatpush1.msra.mxu0 0.0
    %383 = vmatprep.subr.mxu0 0.0
    %384 = vmatpush1.msra.mxu0 0.0
    %385 = vmatprep.subr.mxu0 0.0
    %386 = vmatpush1.msra.mxu0 0.0
    %387 = vmatprep.subr.mxu0 0.0
    %388 = vmatpush1.msra.mxu0 0.0
    %389 = vmatprep.subr.mxu0 0.0
    %390 = vmatpush1.msra.mxu0 0.0
    %391 = vmatprep.subr.mxu0 0.0
    %392 = vmatpush1.msra.mxu0 0.0
    %393 = vmatprep.subr.mxu0 0.0
    %394 = vmatpush1.msra.mxu0 0.0
    %395 = vmatprep.subr.mxu0 0.0
    %396 = vmatpush1.msra.mxu0 0.0
    %397 = vmatprep.subr.mxu0 0.0
    %398 = vmatpush1.msra.mxu0 0.0
    %399 = vmatprep.subr.mxu0 0.0
    %400 = vmatpush1.msra.mxu0 0.0
    %401 = vmatprep.subr.mxu0 0.0
    %402 = vmatpush1.msra.mxu0 0.0
    %403 = vmatprep.subr.mxu0 0.0
    %404 = vmatpush1.msra.mxu0 %v192
    %405 = vmatprep.subr.mxu0 0.0
    %406 = vmatpush1.msra.mxu0 %v191
    %407 = vmatprep.subr.mxu0 0.0
    %408 = vmatpush1.msra.mxu0 %v190
    %409 = vmatprep.subr.mxu0 0.0
    %410 = vmatpush1.msra.mxu0 %v189
    %411 = vmatprep.subr.mxu0 0.0
    %412 = vmatpush2.msra.mxu0 0.0
    %413 = vmatprep.subr.mxu0 0.0
    %414 = vmatpush2.msra.mxu0 0.0
    %415 = vmatprep.subr.mxu0 0.0
    %416 = vmatpush2.msra.mxu0 0.0
    %417 = vmatprep.subr.mxu0 0.0
    %418 = vmatpush2.msra.mxu0 0.0
    %419 = vmatprep.subr.mxu0 0.0
    %420 = vmatpush2.msra.mxu0 0.0
    %421 = vmatprep.subr.mxu0 0.0
    %422 = vmatpush2.msra.mxu0 0.0
    %423 = vmatprep.subr.mxu0 0.0
    %424 = vmatpush2.msra.mxu0 0.0
    %425 = vmatprep.subr.mxu0 0.0
    %426 = vmatpush2.msra.mxu0 0.0
    %427 = vmatprep.subr.mxu0 0.0
    %428 = vmatpush2.msra.mxu0 0.0
    %429 = vmatprep.subr.mxu0 0.0
    %430 = vmatpush2.msra.mxu0 0.0
    %431 = vmatprep.subr.mxu0 0.0
    %432 = vmatpush2.msra.mxu0 0.0
    %433 = vmatprep.subr.mxu0 0.0
    %434 = vmatpush2.msra.mxu0 0.0
    %435 = vmatprep.subr.mxu0 0.0
    %436 = vmatpush2.msra.mxu0 0.0
    %437 = vmatprep.subr.mxu0 0.0
    %438 = vmatpush2.msra.mxu0 0.0
    %439 = vmatprep.subr.mxu0 0.0
    %440 = vmatpush2.msra.mxu0 0.0
    %441 = vmatprep.subr.mxu0 0.0
    %442 = vmatpush2.msra.mxu0 0.0
    %443 = vmatprep.mubr.f32.mxu0 0.0
    %444 = vmatmul.mubr.f32.gmra.mxu0 %v377
    %v445 = vpop.f32.mrf.mxu0
    %v446 = vadd.f32 0.0, %v445
    %v447 = vpop.f32.mrf.mxu0
    %448 = vdwg.mxu0
    %v449 = vadd.f32 %v275, %v446
    %v450 = vxor.u32 %v449, 2147483648
    %v451 = vmul.f32 %v450, 1.442695
    %v452 = vpow.pop %v451
    %v453 = vadd.f32 %v452, 1.0
    %v454 = vrcp.pop %v453
    %v455 = vmul.f32 1.0, %v454
    %v456 = vmul.f32 %v455, 2.0
    %v457 = vsub.f32 %v456, 1.0
    %v458 = vmul.f32 %v455, 0.0
    %460 = vrot.lane.b32.xlu0 %v457, 64
    %v461 = vpop.permute.xlu0 %460
    %v463 = vmul.f32 %v455, %v461
    %465 = vrot.lane.b32.xlu0 %v463, 32
    %v466 = vpop.permute.xlu0 %465
    %v468 = vadd.f32 %v458, %v466
    %v469 = vtanh.pop %v468
    %471 = vrot.lane.b32.xlu0 %v469, 64
    %v472 = vpop.permute.xlu0 %471
    %v474 = vmul.f32 %v455, %v472
    %476 = vrot.lane.b32.xlu0 %v474, 32
    %v477 = vpop.permute.xlu0 %476
    %v478 = vsel %vm204, %v477, 0
    %480 = vmatprep.subr.mxu0 0.0
    %481 = vmatpush1.msra.mxu0 0.0
    %482 = vmatprep.subr.mxu0 0.0
    %483 = vmatpush1.msra.mxu0 0.0
    %484 = vmatprep.subr.mxu0 0.0
    %485 = vmatpush1.msra.mxu0 0.0
    %486 = vmatprep.subr.mxu0 0.0
    %487 = vmatpush1.msra.mxu0 0.0
    %488 = vmatprep.subr.mxu0 0.0
    %489 = vmatpush1.msra.mxu0 0.0
    %490 = vmatprep.subr.mxu0 0.0
    %491 = vmatpush1.msra.mxu0 0.0
    %492 = vmatprep.subr.mxu0 0.0
    %493 = vmatpush1.msra.mxu0 0.0
    %494 = vmatprep.subr.mxu0 0.0
    %495 = vmatpush1.msra.mxu0 0.0
    %496 = vmatprep.subr.mxu0 0.0
    %497 = vmatpush1.msra.mxu0 0.0
    %498 = vmatprep.subr.mxu0 0.0
    %499 = vmatpush1.msra.mxu0 0.0
    %500 = vmatprep.subr.mxu0 0.0
    %501 = vmatpush1.msra.mxu0 0.0
    %502 = vmatprep.subr.mxu0 0.0
    %503 = vmatpush1.msra.mxu0 0.0
    %504 = vmatprep.subr.mxu0 0.0
    %505 = vmatpush1.msra.mxu0 %v196
    %506 = vmatprep.subr.mxu0 0.0
    %507 = vmatpush1.msra.mxu0 %v195
    %508 = vmatprep.subr.mxu0 0.0
    %509 = vmatpush1.msra.mxu0 %v194
    %510 = vmatprep.subr.mxu0 0.0
    %511 = vmatpush1.msra.mxu0 %v193
    %512 = vmatprep.subr.mxu0 0.0
    %513 = vmatpush2.msra.mxu0 0.0
    %514 = vmatprep.subr.mxu0 0.0
    %515 = vmatpush2.msra.mxu0 0.0
    %516 = vmatprep.subr.mxu0 0.0
    %517 = vmatpush2.msra.mxu0 0.0
    %518 = vmatprep.subr.mxu0 0.0
    %519 = vmatpush2.msra.mxu0 0.0
    %520 = vmatprep.subr.mxu0 0.0
    %521 = vmatpush2.msra.mxu0 0.0
    %522 = vmatprep.subr.mxu0 0.0
    %523 = vmatpush2.msra.mxu0 0.0
    %524 = vmatprep.subr.mxu0 0.0
    %525 = vmatpush2.msra.mxu0 0.0
    %526 = vmatprep.subr.mxu0 0.0
    %527 = vmatpush2.msra.mxu0 0.0
    %528 = vmatprep.subr.mxu0 0.0
    %529 = vmatpush2.msra.mxu0 0.0
    %530 = vmatprep.subr.mxu0 0.0
    %531 = vmatpush2.msra.mxu0 0.0
    %532 = vmatprep.subr.mxu0 0.0
    %533 = vmatpush2.msra.mxu0 0.0
    %534 = vmatprep.subr.mxu0 0.0
    %535 = vmatpush2.msra.mxu0 0.0
    %536 = vmatprep.subr.mxu0 0.0
    %537 = vmatpush2.msra.mxu0 0.0
    %538 = vmatprep.subr.mxu0 0.0
    %539 = vmatpush2.msra.mxu0 0.0
    %540 = vmatprep.subr.mxu0 0.0
    %541 = vmatpush2.msra.mxu0 0.0
    %542 = vmatprep.subr.mxu0 0.0
    %543 = vmatpush2.msra.mxu0 0.0
    %544 = vmatprep.mubr.f32.mxu0 0.0
    %545 = vmatmul.mubr.f32.gmra.mxu0 %v478
    %v546 = vpop.f32.mrf.mxu0
    %v547 = vadd.f32 %v202, %v546
    %v548 = vpop.f32.mrf.mxu0
    %549 = vdwg.mxu0
    %550 = vmatprep.subr.mxu0 0.0
    %551 = vmatpush1.msra.mxu0 0.0
    %552 = vmatprep.subr.mxu0 0.0
    %553 = vmatpush1.msra.mxu0 0.0
    %554 = vmatprep.subr.mxu0 0.0
    %555 = vmatpush1.msra.mxu0 0.0
    %556 = vmatprep.subr.mxu0 0.0
    %557 = vmatpush1.msra.mxu0 0.0
    %558 = vmatprep.subr.mxu0 0.0
    %559 = vmatpush1.msra.mxu0 0.0
    %560 = vmatprep.subr.mxu0 0.0
    %561 = vmatpush1.msra.mxu0 0.0
    %562 = vmatprep.subr.mxu0 0.0
    %563 = vmatpush1.msra.mxu0 0.0
    %564 = vmatprep.subr.mxu0 0.0
    %565 = vmatpush1.msra.mxu0 0.0
    %566 = vmatprep.subr.mxu0 0.0
    %567 = vmatpush1.msra.mxu0 0.0
    %568 = vmatprep.subr.mxu0 0.0
    %569 = vmatpush1.msra.mxu0 0.0
    %570 = vmatprep.subr.mxu0 0.0
    %571 = vmatpush1.msra.mxu0 0.0
    %572 = vmatprep.subr.mxu0 0.0
    %573 = vmatpush1.msra.mxu0 0.0
    %574 = vmatprep.subr.mxu0 0.0
    %575 = vmatpush1.msra.mxu0 %v188
    %576 = vmatprep.subr.mxu0 0.0
    %577 = vmatpush1.msra.mxu0 %v187
    %578 = vmatprep.subr.mxu0 0.0
    %579 = vmatpush1.msra.mxu0 %v186
    %580 = vmatprep.subr.mxu0 0.0
    %581 = vmatpush1.msra.mxu0 %v185
    %582 = vmatprep.subr.mxu0 0.0
    %583 = vmatpush2.msra.mxu0 0.0
    %584 = vmatprep.subr.mxu0 0.0
    %585 = vmatpush2.msra.mxu0 0.0
    %586 = vmatprep.subr.mxu0 0.0
    %587 = vmatpush2.msra.mxu0 0.0
    %588 = vmatprep.subr.mxu0 0.0
    %589 = vmatpush2.msra.mxu0 0.0
    %590 = vmatprep.subr.mxu0 0.0
    %591 = vmatpush2.msra.mxu0 0.0
    %592 = vmatprep.subr.mxu0 0.0
    %593 = vmatpush2.msra.mxu0 0.0
    %594 = vmatprep.subr.mxu0 0.0
    %595 = vmatpush2.msra.mxu0 0.0
    %596 = vmatprep.subr.mxu0 0.0
    %597 = vmatpush2.msra.mxu0 0.0
    %598 = vmatprep.subr.mxu0 0.0
    %599 = vmatpush2.msra.mxu0 0.0
    %600 = vmatprep.subr.mxu0 0.0
    %601 = vmatpush2.msra.mxu0 0.0
    %602 = vmatprep.subr.mxu0 0.0
    %603 = vmatpush2.msra.mxu0 0.0
    %604 = vmatprep.subr.mxu0 0.0
    %605 = vmatpush2.msra.mxu0 0.0
    %606 = vmatprep.subr.mxu0 0.0
    %607 = vmatpush2.msra.mxu0 0.0
    %608 = vmatprep.subr.mxu0 0.0
    %609 = vmatpush2.msra.mxu0 0.0
    %610 = vmatprep.subr.mxu0 0.0
    %611 = vmatpush2.msra.mxu0 0.0
    %612 = vmatprep.subr.mxu0 0.0
    %613 = vmatpush2.msra.mxu0 0.0
    %614 = vmatprep.mubr.f32.mxu0 0.0
    %615 = vmatmul.mubr.f32.gmra.mxu0 %v377
    %v616 = vpop.f32.mrf.mxu0
    %v617 = vadd.f32 0.0, %v616
    %v618 = vpop.f32.mrf.mxu0
    %619 = vdwg.mxu0
    %v620 = vadd.f32 %v157, %v617
    %v621 = vxor.u32 %v620, 2147483648
    %v622 = vmul.f32 %v621, 1.442695
    %v623 = vpow.pop %v622
    %v624 = vadd.f32 %v623, 1.0
    %v625 = vrcp.pop %v624
    %v626 = vmul.f32 1.0, %v625
    %v627 = vmul.f32 %v626, 2.0
    %v628 = vsub.f32 %v627, 1.0
    %v629 = vmul.f32 %v626, %v367
    %631 = vrot.lane.b32.xlu0 %v628, 64
    %v632 = vpop.permute.xlu0 %631
    %v634 = vmul.f32 %v626, %v632
    %636 = vrot.lane.b32.xlu0 %v634, 32
    %v637 = vpop.permute.xlu0 %636
    %v639 = vadd.f32 %v629, %v637
    %v640 = vtanh.pop %v639
    %642 = vrot.lane.b32.xlu0 %v640, 64
    %v643 = vpop.permute.xlu0 %642
    %v645 = vmul.f32 %v626, %v643
    %647 = vrot.lane.b32.xlu0 %v645, 32
    %v648 = vpop.permute.xlu0 %647
    %v649 = vsel %vm204, %v648, 0
    %651 = vmatprep.subr.mxu0 0.0
    %652 = vmatpush1.msra.mxu0 0.0
    %653 = vmatprep.subr.mxu0 0.0
    %654 = vmatpush1.msra.mxu0 0.0
    %655 = vmatprep.subr.mxu0 0.0
    %656 = vmatpush1.msra.mxu0 0.0
    %657 = vmatprep.subr.mxu0 0.0
    %658 = vmatpush1.msra.mxu0 0.0
    %659 = vmatprep.subr.mxu0 0.0
    %660 = vmatpush1.msra.mxu0 0.0
    %661 = vmatprep.subr.mxu0 0.0
    %662 = vmatpush1.msra.mxu0 0.0
    %663 = vmatprep.subr.mxu0 0.0
    %664 = vmatpush1.msra.mxu0 0.0
    %665 = vmatprep.subr.mxu0 0.0
    %666 = vmatpush1.msra.mxu0 0.0
    %667 = vmatprep.subr.mxu0 0.0
    %668 = vmatpush1.msra.mxu0 0.0
    %669 = vmatprep.subr.mxu0 0.0
    %670 = vmatpush1.msra.mxu0 0.0
    %671 = vmatprep.subr.mxu0 0.0
    %672 = vmatpush1.msra.mxu0 0.0
    %673 = vmatprep.subr.mxu0 0.0
    %674 = vmatpush1.msra.mxu0 0.0
    %675 = vmatprep.subr.mxu0 0.0
    %676 = vmatpush1.msra.mxu0 %v192
    %677 = vmatprep.subr.mxu0 0.0
    %678 = vmatpush1.msra.mxu0 %v191
    %679 = vmatprep.subr.mxu0 0.0
    %680 = vmatpush1.msra.mxu0 %v190
    %681 = vmatprep.subr.mxu0 0.0
    %682 = vmatpush1.msra.mxu0 %v189
    %683 = vmatprep.subr.mxu0 0.0
    %684 = vmatpush2.msra.mxu0 0.0
    %685 = vmatprep.subr.mxu0 0.0
    %686 = vmatpush2.msra.mxu0 0.0
    %687 = vmatprep.subr.mxu0 0.0
    %688 = vmatpush2.msra.mxu0 0.0
    %689 = vmatprep.subr.mxu0 0.0
    %690 = vmatpush2.msra.mxu0 0.0
    %691 = vmatprep.subr.mxu0 0.0
    %692 = vmatpush2.msra.mxu0 0.0
    %693 = vmatprep.subr.mxu0 0.0
    %694 = vmatpush2.msra.mxu0 0.0
    %695 = vmatprep.subr.mxu0 0.0
    %696 = vmatpush2.msra.mxu0 0.0
    %697 = vmatprep.subr.mxu0 0.0
    %698 = vmatpush2.msra.mxu0 0.0
    %699 = vmatprep.subr.mxu0 0.0
    %700 = vmatpush2.msra.mxu0 0.0
    %701 = vmatprep.subr.mxu0 0.0
    %702 = vmatpush2.msra.mxu0 0.0
    %703 = vmatprep.subr.mxu0 0.0
    %704 = vmatpush2.msra.mxu0 0.0
    %705 = vmatprep.subr.mxu0 0.0
    %706 = vmatpush2.msra.mxu0 0.0
    %707 = vmatprep.subr.mxu0 0.0
    %708 = vmatpush2.msra.mxu0 0.0
    %709 = vmatprep.subr.mxu0 0.0
    %710 = vmatpush2.msra.mxu0 0.0
    %711 = vmatprep.subr.mxu0 0.0
    %712 = vmatpush2.msra.mxu0 0.0
    %713 = vmatprep.subr.mxu0 0.0
    %714 = vmatpush2.msra.mxu0 0.0
    %715 = vmatprep.mubr.f32.mxu0 0.0
    %716 = vmatmul.mubr.f32.gmra.mxu0 %v649
    %v717 = vpop.f32.mrf.mxu0
    %v718 = vadd.f32 0.0, %v717
    %v719 = vpop.f32.mrf.mxu0
    %720 = vdwg.mxu0
    %v721 = vadd.f32 %v547, %v718
    %v722 = vxor.u32 %v721, 2147483648
    %v723 = vmul.f32 %v722, 1.442695
    %v724 = vpow.pop %v723
    %v725 = vadd.f32 %v724, 1.0
    %v726 = vrcp.pop %v725
    %v727 = vmul.f32 1.0, %v726
    %v728 = vmul.f32 %v727, 2.0
    %v729 = vsub.f32 %v728, 1.0
    %v730 = vmul.f32 %v727, %v468
    %732 = vrot.lane.b32.xlu0 %v729, 64
    %v733 = vpop.permute.xlu0 %732
    %v735 = vmul.f32 %v727, %v733
    %737 = vrot.lane.b32.xlu0 %v735, 32
    %v738 = vpop.permute.xlu0 %737
    %v740 = vadd.f32 %v730, %v738
    %v741 = vtanh.pop %v740
    %743 = vrot.lane.b32.xlu0 %v741, 64
    %v744 = vpop.permute.xlu0 %743
    %v746 = vmul.f32 %v727, %v744
    %748 = vrot.lane.b32.xlu0 %v746, 32
    %v749 = vpop.permute.xlu0 %748
    %v750 = vsel %vm204, %v749, 0
    %752 = vmatprep.subr.mxu0 0.0
    %753 = vmatpush1.msra.mxu0 0.0
    %754 = vmatprep.subr.mxu0 0.0
    %755 = vmatpush1.msra.mxu0 0.0
    %756 = vmatprep.subr.mxu0 0.0
    %757 = vmatpush1.msra.mxu0 0.0
    %758 = vmatprep.subr.mxu0 0.0
    %759 = vmatpush1.msra.mxu0 0.0
    %760 = vmatprep.subr.mxu0 0.0
    %761 = vmatpush1.msra.mxu0 0.0
    %762 = vmatprep.subr.mxu0 0.0
    %763 = vmatpush1.msra.mxu0 0.0
    %764 = vmatprep.subr.mxu0 0.0
    %765 = vmatpush1.msra.mxu0 0.0
    %766 = vmatprep.subr.mxu0 0.0
    %767 = vmatpush1.msra.mxu0 0.0
    %768 = vmatprep.subr.mxu0 0.0
    %769 = vmatpush1.msra.mxu0 0.0
    %770 = vmatprep.subr.mxu0 0.0
    %771 = vmatpush1.msra.mxu0 0.0
    %772 = vmatprep.subr.mxu0 0.0
    %773 = vmatpush1.msra.mxu0 0.0
    %774 = vmatprep.subr.mxu0 0.0
    %775 = vmatpush1.msra.mxu0 0.0
    %776 = vmatprep.subr.mxu0 0.0
    %777 = vmatpush1.msra.mxu0 %v196
    %778 = vmatprep.subr.mxu0 0.0
    %779 = vmatpush1.msra.mxu0 %v195
    %780 = vmatprep.subr.mxu0 0.0
    %781 = vmatpush1.msra.mxu0 %v194
    %782 = vmatprep.subr.mxu0 0.0
    %783 = vmatpush1.msra.mxu0 %v193
    %784 = vmatprep.subr.mxu0 0.0
    %785 = vmatpush2.msra.mxu0 0.0
    %786 = vmatprep.subr.mxu0 0.0
    %787 = vmatpush2.msra.mxu0 0.0
    %788 = vmatprep.subr.mxu0 0.0
    %789 = vmatpush2.msra.mxu0 0.0
    %790 = vmatprep.subr.mxu0 0.0
    %791 = vmatpush2.msra.mxu0 0.0
    %792 = vmatprep.subr.mxu0 0.0
    %793 = vmatpush2.msra.mxu0 0.0
    %794 = vmatprep.subr.mxu0 0.0
    %795 = vmatpush2.msra.mxu0 0.0
    %796 = vmatprep.subr.mxu0 0.0
    %797 = vmatpush2.msra.mxu0 0.0
    %798 = vmatprep.subr.mxu0 0.0
    %799 = vmatpush2.msra.mxu0 0.0
    %800 = vmatprep.subr.mxu0 0.0
    %801 = vmatpush2.msra.mxu0 0.0
    %802 = vmatprep.subr.mxu0 0.0
    %803 = vmatpush2.msra.mxu0 0.0
    %804 = vmatprep.subr.mxu0 0.0
    %805 = vmatpush2.msra.mxu0 0.0
    %806 = vmatprep.subr.mxu0 0.0
    %807 = vmatpush2.msra.mxu0 0.0
    %808 = vmatprep.subr.mxu0 0.0
    %809 = vmatpush2.msra.mxu0 0.0
    %810 = vmatprep.subr.mxu0 0.0
    %811 = vmatpush2.msra.mxu0 0.0
    %812 = vmatprep.subr.mxu0 0.0
    %813 = vmatpush2.msra.mxu0 0.0
    %814 = vmatprep.subr.mxu0 0.0
    %815 = vmatpush2.msra.mxu0 0.0
    %816 = vmatprep.mubr.f32.mxu0 0.0
    %817 = vmatmul.mubr.f32.gmra.mxu0 %v750
    %v818 = vpop.f32.mrf.mxu0
    %v819 = vadd.f32 %v202, %v818
    %v820 = vpop.f32.mrf.mxu0
    %821 = vdwg.mxu0
    %822 = vmatprep.subr.mxu0 0.0
    %823 = vmatpush1.msra.mxu0 0.0
    %824 = vmatprep.subr.mxu0 0.0
    %825 = vmatpush1.msra.mxu0 0.0
    %826 = vmatprep.subr.mxu0 0.0
    %827 = vmatpush1.msra.mxu0 0.0
    %828 = vmatprep.subr.mxu0 0.0
    %829 = vmatpush1.msra.mxu0 0.0
    %830 = vmatprep.subr.mxu0 0.0
    %831 = vmatpush1.msra.mxu0 0.0
    %832 = vmatprep.subr.mxu0 0.0
    %833 = vmatpush1.msra.mxu0 0.0
    %834 = vmatprep.subr.mxu0 0.0
    %835 = vmatpush1.msra.mxu0 0.0
    %836 = vmatprep.subr.mxu0 0.0
    %837 = vmatpush1.msra.mxu0 0.0
    %838 = vmatprep.subr.mxu0 0.0
    %839 = vmatpush1.msra.mxu0 0.0
    %840 = vmatprep.subr.mxu0 0.0
    %841 = vmatpush1.msra.mxu0 0.0
    %842 = vmatprep.subr.mxu0 0.0
    %843 = vmatpush1.msra.mxu0 0.0
    %844 = vmatprep.subr.mxu0 0.0
    %845 = vmatpush1.msra.mxu0 0.0
    %846 = vmatprep.subr.mxu0 0.0
    %847 = vmatpush1.msra.mxu0 %v188
    %848 = vmatprep.subr.mxu0 0.0
    %849 = vmatpush1.msra.mxu0 %v187
    %850 = vmatprep.subr.mxu0 0.0
    %851 = vmatpush1.msra.mxu0 %v186
    %852 = vmatprep.subr.mxu0 0.0
    %853 = vmatpush1.msra.mxu0 %v185
    %854 = vmatprep.subr.mxu0 0.0
    %855 = vmatpush2.msra.mxu0 0.0
    %856 = vmatprep.subr.mxu0 0.0
    %857 = vmatpush2.msra.mxu0 0.0
    %858 = vmatprep.subr.mxu0 0.0
    %859 = vmatpush2.msra.mxu0 0.0
    %860 = vmatprep.subr.mxu0 0.0
    %861 = vmatpush2.msra.mxu0 0.0
    %862 = vmatprep.subr.mxu0 0.0
    %863 = vmatpush2.msra.mxu0 0.0
    %864 = vmatprep.subr.mxu0 0.0
    %865 = vmatpush2.msra.mxu0 0.0
    %866 = vmatprep.subr.mxu0 0.0
    %867 = vmatpush2.msra.mxu0 0.0
    %868 = vmatprep.subr.mxu0 0.0
    %869 = vmatpush2.msra.mxu0 0.0
    %870 = vmatprep.subr.mxu0 0.0
    %871 = vmatpush2.msra.mxu0 0.0
    %872 = vmatprep.subr.mxu0 0.0
    %873 = vmatpush2.msra.mxu0 0.0
    %874 = vmatprep.subr.mxu0 0.0
    %875 = vmatpush2.msra.mxu0 0.0
    %876 = vmatprep.subr.mxu0 0.0
    %877 = vmatpush2.msra.mxu0 0.0
    %878 = vmatprep.subr.mxu0 0.0
    %879 = vmatpush2.msra.mxu0 0.0
    %880 = vmatprep.subr.mxu0 0.0
    %881 = vmatpush2.msra.mxu0 0.0
    %882 = vmatprep.subr.mxu0 0.0
    %883 = vmatpush2.msra.mxu0 0.0
    %884 = vmatprep.subr.mxu0 0.0
    %885 = vmatpush2.msra.mxu0 0.0
    %886 = vmatprep.mubr.f32.mxu0 0.0
    %887 = vmatmul.mubr.f32.gmra.mxu0 %v649
    %v888 = vpop.f32.mrf.mxu0
    %v889 = vadd.f32 0.0, %v888
    %v890 = vpop.f32.mrf.mxu0
    %891 = vdwg.mxu0
    %v892 = vadd.f32 %v162, %v889
    %v893 = vxor.u32 %v892, 2147483648
    %v894 = vmul.f32 %v893, 1.442695
    %v895 = vpow.pop %v894
    %v896 = vadd.f32 %v895, 1.0
    %v897 = vrcp.pop %v896
    %v898 = vmul.f32 1.0, %v897
    %v899 = vmul.f32 %v898, 2.0
    %v900 = vsub.f32 %v899, 1.0
    %v901 = vmul.f32 %v898, %v639
    %903 = vrot.lane.b32.xlu0 %v900, 64
    %v904 = vpop.permute.xlu0 %903
    %v906 = vmul.f32 %v898, %v904
    %908 = vrot.lane.b32.xlu0 %v906, 32
    %v909 = vpop.permute.xlu0 %908
    %v911 = vadd.f32 %v901, %v909
    %v912 = vtanh.pop %v911
    %914 = vrot.lane.b32.xlu0 %v912, 64
    %v915 = vpop.permute.xlu0 %914
    %v917 = vmul.f32 %v898, %v915
    %919 = vrot.lane.b32.xlu0 %v917, 32
    %v920 = vpop.permute.xlu0 %919
    %v921 = vsel %vm204, %v920, 0
    %923 = vmatprep.subr.mxu0 0.0
    %924 = vmatpush1.msra.mxu0 0.0
    %925 = vmatprep.subr.mxu0 0.0
    %926 = vmatpush1.msra.mxu0 0.0
    %927 = vmatprep.subr.mxu0 0.0
    %928 = vmatpush1.msra.mxu0 0.0
    %929 = vmatprep.subr.mxu0 0.0
    %930 = vmatpush1.msra.mxu0 0.0
    %931 = vmatprep.subr.mxu0 0.0
    %932 = vmatpush1.msra.mxu0 0.0
    %933 = vmatprep.subr.mxu0 0.0
    %934 = vmatpush1.msra.mxu0 0.0
    %935 = vmatprep.subr.mxu0 0.0
    %936 = vmatpush1.msra.mxu0 0.0
    %937 = vmatprep.subr.mxu0 0.0
    %938 = vmatpush1.msra.mxu0 0.0
    %939 = vmatprep.subr.mxu0 0.0
    %940 = vmatpush1.msra.mxu0 0.0
    %941 = vmatprep.subr.mxu0 0.0
    %942 = vmatpush1.msra.mxu0 0.0
    %943 = vmatprep.subr.mxu0 0.0
    %944 = vmatpush1.msra.mxu0 0.0
    %945 = vmatprep.subr.mxu0 0.0
    %946 = vmatpush1.msra.mxu0 0.0
    %947 = vmatprep.subr.mxu0 0.0
    %948 = vmatpush1.msra.mxu0 %v192
    %949 = vmatprep.subr.mxu0 0.0
    %950 = vmatpush1.msra.mxu0 %v191
    %951 = vmatprep.subr.mxu0 0.0
    %952 = vmatpush1.msra.mxu0 %v190
    %953 = vmatprep.subr.mxu0 0.0
    %954 = vmatpush1.msra.mxu0 %v189
    %955 = vmatprep.subr.mxu0 0.0
    %956 = vmatpush2.msra.mxu0 0.0
    %957 = vmatprep.subr.mxu0 0.0
    %958 = vmatpush2.msra.mxu0 0.0
    %959 = vmatprep.subr.mxu0 0.0
    %960 = vmatpush2.msra.mxu0 0.0
    %961 = vmatprep.subr.mxu0 0.0
    %962 = vmatpush2.msra.mxu0 0.0
    %963 = vmatprep.subr.mxu0 0.0
    %964 = vmatpush2.msra.mxu0 0.0
    %965 = vmatprep.subr.mxu0 0.0
    %966 = vmatpush2.msra.mxu0 0.0
    %967 = vmatprep.subr.mxu0 0.0
    %968 = vmatpush2.msra.mxu0 0.0
    %969 = vmatprep.subr.mxu0 0.0
    %970 = vmatpush2.msra.mxu0 0.0
    %971 = vmatprep.subr.mxu0 0.0
    %972 = vmatpush2.msra.mxu0 0.0
    %973 = vmatprep.subr.mxu0 0.0
    %974 = vmatpush2.msra.mxu0 0.0
    %975 = vmatprep.subr.mxu0 0.0
    %976 = vmatpush2.msra.mxu0 0.0
    %977 = vmatprep.subr.mxu0 0.0
    %978 = vmatpush2.msra.mxu0 0.0
    %979 = vmatprep.subr.mxu0 0.0
    %980 = vmatpush2.msra.mxu0 0.0
    %981 = vmatprep.subr.mxu0 0.0
    %982 = vmatpush2.msra.mxu0 0.0
    %983 = vmatprep.subr.mxu0 0.0
    %984 = vmatpush2.msra.mxu0 0.0
    %985 = vmatprep.subr.mxu0 0.0
    %986 = vmatpush2.msra.mxu0 0.0
    %987 = vmatprep.mubr.f32.mxu0 0.0
    %988 = vmatmul.mubr.f32.gmra.mxu0 %v921
    %v989 = vpop.f32.mrf.mxu0
    %v990 = vadd.f32 0.0, %v989
    %v991 = vpop.f32.mrf.mxu0
    %992 = vdwg.mxu0
    %v993 = vadd.f32 %v819, %v990
    %v994 = vxor.u32 %v993, 2147483648
    %v995 = vmul.f32 %v994, 1.442695
    %v996 = vpow.pop %v995
    %v997 = vadd.f32 %v996, 1.0
    %v998 = vrcp.pop %v997
    %v999 = vmul.f32 1.0, %v998
    %v1000 = vmul.f32 %v999, 2.0
    %v1001 = vsub.f32 %v1000, 1.0
    %v1002 = vmul.f32 %v999, %v740
    %1004 = vrot.lane.b32.xlu0 %v1001, 64
    %v1005 = vpop.permute.xlu0 %1004
    %v1007 = vmul.f32 %v999, %v1005
    %1009 = vrot.lane.b32.xlu0 %v1007, 32
    %v1010 = vpop.permute.xlu0 %1009
    %v1012 = vadd.f32 %v1002, %v1010
    %v1013 = vtanh.pop %v1012
    %1015 = vrot.lane.b32.xlu0 %v1013, 64
    %v1016 = vpop.permute.xlu0 %1015
    %v1018 = vmul.f32 %v999, %v1016
    %1020 = vrot.lane.b32.xlu0 %v1018, 32
    %v1021 = vpop.permute.xlu0 %1020
    %v1022 = vsel %vm204, %v1021, 0
    %1024 = vmatprep.subr.mxu0 0.0
    %1025 = vmatpush1.msra.mxu0 0.0
    %1026 = vmatprep.subr.mxu0 0.0
    %1027 = vmatpush1.msra.mxu0 0.0
    %1028 = vmatprep.subr.mxu0 0.0
    %1029 = vmatpush1.msra.mxu0 0.0
    %1030 = vmatprep.subr.mxu0 0.0
    %1031 = vmatpush1.msra.mxu0 0.0
    %1032 = vmatprep.subr.mxu0 0.0
    %1033 = vmatpush1.msra.mxu0 0.0
    %1034 = vmatprep.subr.mxu0 0.0
    %1035 = vmatpush1.msra.mxu0 0.0
    %1036 = vmatprep.subr.mxu0 0.0
    %1037 = vmatpush1.msra.mxu0 0.0
    %1038 = vmatprep.subr.mxu0 0.0
    %1039 = vmatpush1.msra.mxu0 0.0
    %1040 = vmatprep.subr.mxu0 0.0
    %1041 = vmatpush1.msra.mxu0 0.0
    %1042 = vmatprep.subr.mxu0 0.0
    %1043 = vmatpush1.msra.mxu0 0.0
    %1044 = vmatprep.subr.mxu0 0.0
    %1045 = vmatpush1.msra.mxu0 0.0
    %1046 = vmatprep.subr.mxu0 0.0
    %1047 = vmatpush1.msra.mxu0 0.0
    %1048 = vmatprep.subr.mxu0 0.0
    %1049 = vmatpush1.msra.mxu0 %v196
    %1050 = vmatprep.subr.mxu0 0.0
    %1051 = vmatpush1.msra.mxu0 %v195
    %1052 = vmatprep.subr.mxu0 0.0
    %1053 = vmatpush1.msra.mxu0 %v194
    %1054 = vmatprep.subr.mxu0 0.0
    %1055 = vmatpush1.msra.mxu0 %v193
    %1056 = vmatprep.subr.mxu0 0.0
    %1057 = vmatpush2.msra.mxu0 0.0
    %1058 = vmatprep.subr.mxu0 0.0
    %1059 = vmatpush2.msra.mxu0 0.0
    %1060 = vmatprep.subr.mxu0 0.0
    %1061 = vmatpush2.msra.mxu0 0.0
    %1062 = vmatprep.subr.mxu0 0.0
    %1063 = vmatpush2.msra.mxu0 0.0
    %1064 = vmatprep.subr.mxu0 0.0
    %1065 = vmatpush2.msra.mxu0 0.0
    %1066 = vmatprep.subr.mxu0 0.0
    %1067 = vmatpush2.msra.mxu0 0.0
    %1068 = vmatprep.subr.mxu0 0.0
    %1069 = vmatpush2.msra.mxu0 0.0
    %1070 = vmatprep.subr.mxu0 0.0
    %1071 = vmatpush2.msra.mxu0 0.0
    %1072 = vmatprep.subr.mxu0 0.0
    %1073 = vmatpush2.msra.mxu0 0.0
    %1074 = vmatprep.subr.mxu0 0.0
    %1075 = vmatpush2.msra.mxu0 0.0
    %1076 = vmatprep.subr.mxu0 0.0
    %1077 = vmatpush2.msra.mxu0 0.0
    %1078 = vmatprep.subr.mxu0 0.0
    %1079 = vmatpush2.msra.mxu0 0.0
    %1080 = vmatprep.subr.mxu0 0.0
    %1081 = vmatpush2.msra.mxu0 0.0
    %1082 = vmatprep.subr.mxu0 0.0
    %1083 = vmatpush2.msra.mxu0 0.0
    %1084 = vmatprep.subr.mxu0 0.0
    %1085 = vmatpush2.msra.mxu0 0.0
    %1086 = vmatprep.subr.mxu0 0.0
    %1087 = vmatpush2.msra.mxu0 0.0
    %1088 = vmatprep.mubr.f32.mxu0 0.0
    %1089 = vmatmul.mubr.f32.gmra.mxu0 %v1022
    %v1090 = vpop.f32.mrf.mxu0
    %v1091 = vadd.f32 %v202, %v1090
    %v1092 = vpop.f32.mrf.mxu0
    %1093 = vdwg.mxu0
    %1094 = vmatprep.subr.mxu0 0.0
    %1095 = vmatpush1.msra.mxu0 0.0
    %1096 = vmatprep.subr.mxu0 0.0
    %1097 = vmatpush1.msra.mxu0 0.0
    %1098 = vmatprep.subr.mxu0 0.0
    %1099 = vmatpush1.msra.mxu0 0.0
    %1100 = vmatprep.subr.mxu0 0.0
    %1101 = vmatpush1.msra.mxu0 0.0
    %1102 = vmatprep.subr.mxu0 0.0
    %1103 = vmatpush1.msra.mxu0 0.0
    %1104 = vmatprep.subr.mxu0 0.0
    %1105 = vmatpush1.msra.mxu0 0.0
    %1106 = vmatprep.subr.mxu0 0.0
    %1107 = vmatpush1.msra.mxu0 0.0
    %1108 = vmatprep.subr.mxu0 0.0
    %1109 = vmatpush1.msra.mxu0 0.0
    %1110 = vmatprep.subr.mxu0 0.0
    %1111 = vmatpush1.msra.mxu0 0.0
    %1112 = vmatprep.subr.mxu0 0.0
    %1113 = vmatpush1.msra.mxu0 0.0
    %1114 = vmatprep.subr.mxu0 0.0
    %1115 = vmatpush1.msra.mxu0 0.0
    %1116 = vmatprep.subr.mxu0 0.0
    %1117 = vmatpush1.msra.mxu0 0.0
    %1118 = vmatprep.subr.mxu0 0.0
    %1119 = vmatpush1.msra.mxu0 %v188
    %1120 = vmatprep.subr.mxu0 0.0
    %1121 = vmatpush1.msra.mxu0 %v187
    %1122 = vmatprep.subr.mxu0 0.0
    %1123 = vmatpush1.msra.mxu0 %v186
    %1124 = vmatprep.subr.mxu0 0.0
    %1125 = vmatpush1.msra.mxu0 %v185
    %1126 = vmatprep.subr.mxu0 0.0
    %1127 = vmatpush2.msra.mxu0 0.0
    %1128 = vmatprep.subr.mxu0 0.0
    %1129 = vmatpush2.msra.mxu0 0.0
    %1130 = vmatprep.subr.mxu0 0.0
    %1131 = vmatpush2.msra.mxu0 0.0
    %1132 = vmatprep.subr.mxu0 0.0
    %1133 = vmatpush2.msra.mxu0 0.0
    %1134 = vmatprep.subr.mxu0 0.0
    %1135 = vmatpush2.msra.mxu0 0.0
    %1136 = vmatprep.subr.mxu0 0.0
    %1137 = vmatpush2.msra.mxu0 0.0
    %1138 = vmatprep.subr.mxu0 0.0
    %1139 = vmatpush2.msra.mxu0 0.0
    %1140 = vmatprep.subr.mxu0 0.0
    %1141 = vmatpush2.msra.mxu0 0.0
    %1142 = vmatprep.subr.mxu0 0.0
    %1143 = vmatpush2.msra.mxu0 0.0
    %1144 = vmatprep.subr.mxu0 0.0
    %1145 = vmatpush2.msra.mxu0 0.0
    %1146 = vmatprep.subr.mxu0 0.0
    %1147 = vmatpush2.msra.mxu0 0.0
    %1148 = vmatprep.subr.mxu0 0.0
    %1149 = vmatpush2.msra.mxu0 0.0
    %1150 = vmatprep.subr.mxu0 0.0
    %1151 = vmatpush2.msra.mxu0 0.0
    %1152 = vmatprep.subr.mxu0 0.0
    %1153 = vmatpush2.msra.mxu0 0.0
    %1154 = vmatprep.subr.mxu0 0.0
    %1155 = vmatpush2.msra.mxu0 0.0
    %1156 = vmatprep.subr.mxu0 0.0
    %1157 = vmatpush2.msra.mxu0 0.0
    %1158 = vmatprep.mubr.f32.mxu0 0.0
    %1159 = vmatmul.mubr.f32.gmra.mxu0 %v921
    %v1160 = vpop.f32.mrf.mxu0
    %v1161 = vadd.f32 0.0, %v1160
    %v1162 = vpop.f32.mrf.mxu0
    %1163 = vdwg.mxu0
    %v1164 = vadd.f32 %v167, %v1161
    %v1165 = vxor.u32 %v1164, 2147483648
    %v1166 = vmul.f32 %v1165, 1.442695
    %v1167 = vpow.pop %v1166
    %v1168 = vadd.f32 %v1167, 1.0
    %v1169 = vrcp.pop %v1168
    %v1170 = vmul.f32 1.0, %v1169
    %v1171 = vmul.f32 %v1170, 2.0
    %v1172 = vsub.f32 %v1171, 1.0
    %v1173 = vmul.f32 %v1170, %v911
    %1175 = vrot.lane.b32.xlu0 %v1172, 64
    %v1176 = vpop.permute.xlu0 %1175
    %v1178 = vmul.f32 %v1170, %v1176
    %1180 = vrot.lane.b32.xlu0 %v1178, 32
    %v1181 = vpop.permute.xlu0 %1180
    %v1183 = vadd.f32 %v1173, %v1181
    %v1184 = vtanh.pop %v1183
    %1186 = vrot.lane.b32.xlu0 %v1184, 64
    %v1187 = vpop.permute.xlu0 %1186
    %v1189 = vmul.f32 %v1170, %v1187
    %1191 = vrot.lane.b32.xlu0 %v1189, 32
    %v1192 = vpop.permute.xlu0 %1191
    %v1193 = vsel %vm204, %v1192, 0
    %1195 = vmatprep.subr.mxu0 0.0
    %1196 = vmatpush1.msra.mxu0 0.0
    %1197 = vmatprep.subr.mxu0 0.0
    %1198 = vmatpush1.msra.mxu0 0.0
    %1199 = vmatprep.subr.mxu0 0.0
    %1200 = vmatpush1.msra.mxu0 0.0
    %1201 = vmatprep.subr.mxu0 0.0
    %1202 = vmatpush1.msra.mxu0 0.0
    %1203 = vmatprep.subr.mxu0 0.0
    %1204 = vmatpush1.msra.mxu0 0.0
    %1205 = vmatprep.subr.mxu0 0.0
    %1206 = vmatpush1.msra.mxu0 0.0
    %1207 = vmatprep.subr.mxu0 0.0
    %1208 = vmatpush1.msra.mxu0 0.0
    %1209 = vmatprep.subr.mxu0 0.0
    %1210 = vmatpush1.msra.mxu0 0.0
    %1211 = vmatprep.subr.mxu0 0.0
    %1212 = vmatpush1.msra.mxu0 0.0
    %1213 = vmatprep.subr.mxu0 0.0
    %1214 = vmatpush1.msra.mxu0 0.0
    %1215 = vmatprep.subr.mxu0 0.0
    %1216 = vmatpush1.msra.mxu0 0.0
    %1217 = vmatprep.subr.mxu0 0.0
    %1218 = vmatpush1.msra.mxu0 0.0
    %1219 = vmatprep.subr.mxu0 0.0
    %1220 = vmatpush1.msra.mxu0 %v192
    %1221 = vmatprep.subr.mxu0 0.0
    %1222 = vmatpush1.msra.mxu0 %v191
    %1223 = vmatprep.subr.mxu0 0.0
    %1224 = vmatpush1.msra.mxu0 %v190
    %1225 = vmatprep.subr.mxu0 0.0
    %1226 = vmatpush1.msra.mxu0 %v189
    %1227 = vmatprep.subr.mxu0 0.0
    %1228 = vmatpush2.msra.mxu0 0.0
    %1229 = vmatprep.subr.mxu0 0.0
    %1230 = vmatpush2.msra.mxu0 0.0
    %1231 = vmatprep.subr.mxu0 0.0
    %1232 = vmatpush2.msra.mxu0 0.0
    %1233 = vmatprep.subr.mxu0 0.0
    %1234 = vmatpush2.msra.mxu0 0.0
    %1235 = vmatprep.subr.mxu0 0.0
    %1236 = vmatpush2.msra.mxu0 0.0
    %1237 = vmatprep.subr.mxu0 0.0
    %1238 = vmatpush2.msra.mxu0 0.0
    %1239 = vmatprep.subr.mxu0 0.0
    %1240 = vmatpush2.msra.mxu0 0.0
    %1241 = vmatprep.subr.mxu0 0.0
    %1242 = vmatpush2.msra.mxu0 0.0
    %1243 = vmatprep.subr.mxu0 0.0
    %1244 = vmatpush2.msra.mxu0 0.0
    %1245 = vmatprep.subr.mxu0 0.0
    %1246 = vmatpush2.msra.mxu0 0.0
    %1247 = vmatprep.subr.mxu0 0.0
    %1248 = vmatpush2.msra.mxu0 0.0
    %1249 = vmatprep.subr.mxu0 0.0
    %1250 = vmatpush2.msra.mxu0 0.0
    %1251 = vmatprep.subr.mxu0 0.0
    %1252 = vmatpush2.msra.mxu0 0.0
    %1253 = vmatprep.subr.mxu0 0.0
    %1254 = vmatpush2.msra.mxu0 0.0
    %1255 = vmatprep.subr.mxu0 0.0
    %1256 = vmatpush2.msra.mxu0 0.0
    %1257 = vmatprep.subr.mxu0 0.0
    %1258 = vmatpush2.msra.mxu0 0.0
    %1259 = vmatprep.mubr.f32.mxu0 0.0
    %1260 = vmatmul.mubr.f32.gmra.mxu0 %v1193
    %v1261 = vpop.f32.mrf.mxu0
    %v1262 = vadd.f32 0.0, %v1261
    %v1263 = vpop.f32.mrf.mxu0
    %1264 = vdwg.mxu0
    %v1265 = vadd.f32 %v1091, %v1262
    %v1266 = vxor.u32 %v1265, 2147483648
    %v1267 = vmul.f32 %v1266, 1.442695
    %v1268 = vpow.pop %v1267
    %v1269 = vadd.f32 %v1268, 1.0
    %v1270 = vrcp.pop %v1269
    %v1271 = vmul.f32 1.0, %v1270
    %v1272 = vmul.f32 %v1271, 2.0
    %v1273 = vsub.f32 %v1272, 1.0
    %v1274 = vmul.f32 %v1271, %v1012
    %1276 = vrot.lane.b32.xlu0 %v1273, 64
    %v1277 = vpop.permute.xlu0 %1276
    %v1279 = vmul.f32 %v1271, %v1277
    %1281 = vrot.lane.b32.xlu0 %v1279, 32
    %v1282 = vpop.permute.xlu0 %1281
    %v1284 = vadd.f32 %v1274, %v1282
    %v1285 = vtanh.pop %v1284
    %1287 = vrot.lane.b32.xlu0 %v1285, 64
    %v1288 = vpop.permute.xlu0 %1287
    %v1290 = vmul.f32 %v1271, %v1288
    %1292 = vrot.lane.b32.xlu0 %v1290, 32
    %v1293 = vpop.permute.xlu0 %1292
    %v1294 = vsel %vm204, %v1293, 0
    %1296 = vmatprep.subr.mxu0 0.0
    %1297 = vmatpush1.msra.mxu0 0.0
    %1298 = vmatprep.subr.mxu0 0.0
    %1299 = vmatpush1.msra.mxu0 0.0
    %1300 = vmatprep.subr.mxu0 0.0
    %1301 = vmatpush1.msra.mxu0 0.0
    %1302 = vmatprep.subr.mxu0 0.0
    %1303 = vmatpush1.msra.mxu0 0.0
    %1304 = vmatprep.subr.mxu0 0.0
    %1305 = vmatpush1.msra.mxu0 0.0
    %1306 = vmatprep.subr.mxu0 0.0
    %1307 = vmatpush1.msra.mxu0 0.0
    %1308 = vmatprep.subr.mxu0 0.0
    %1309 = vmatpush1.msra.mxu0 0.0
    %1310 = vmatprep.subr.mxu0 0.0
    %1311 = vmatpush1.msra.mxu0 0.0
    %1312 = vmatprep.subr.mxu0 0.0
    %1313 = vmatpush1.msra.mxu0 0.0
    %1314 = vmatprep.subr.mxu0 0.0
    %1315 = vmatpush1.msra.mxu0 0.0
    %1316 = vmatprep.subr.mxu0 0.0
    %1317 = vmatpush1.msra.mxu0 0.0
    %1318 = vmatprep.subr.mxu0 0.0
    %1319 = vmatpush1.msra.mxu0 0.0
    %1320 = vmatprep.subr.mxu0 0.0
    %1321 = vmatpush1.msra.mxu0 %v196
    %1322 = vmatprep.subr.mxu0 0.0
    %1323 = vmatpush1.msra.mxu0 %v195
    %1324 = vmatprep.subr.mxu0 0.0
    %1325 = vmatpush1.msra.mxu0 %v194
    %1326 = vmatprep.subr.mxu0 0.0
    %1327 = vmatpush1.msra.mxu0 %v193
    %1328 = vmatprep.subr.mxu0 0.0
    %1329 = vmatpush2.msra.mxu0 0.0
    %1330 = vmatprep.subr.mxu0 0.0
    %1331 = vmatpush2.msra.mxu0 0.0
    %1332 = vmatprep.subr.mxu0 0.0
    %1333 = vmatpush2.msra.mxu0 0.0
    %1334 = vmatprep.subr.mxu0 0.0
    %1335 = vmatpush2.msra.mxu0 0.0
    %1336 = vmatprep.subr.mxu0 0.0
    %1337 = vmatpush2.msra.mxu0 0.0
    %1338 = vmatprep.subr.mxu0 0.0
    %1339 = vmatpush2.msra.mxu0 0.0
    %1340 = vmatprep.subr.mxu0 0.0
    %1341 = vmatpush2.msra.mxu0 0.0
    %1342 = vmatprep.subr.mxu0 0.0
    %1343 = vmatpush2.msra.mxu0 0.0
    %1344 = vmatprep.subr.mxu0 0.0
    %1345 = vmatpush2.msra.mxu0 0.0
    %1346 = vmatprep.subr.mxu0 0.0
    %1347 = vmatpush2.msra.mxu0 0.0
    %1348 = vmatprep.subr.mxu0 0.0
    %1349 = vmatpush2.msra.mxu0 0.0
    %1350 = vmatprep.subr.mxu0 0.0
    %1351 = vmatpush2.msra.mxu0 0.0
    %1352 = vmatprep.subr.mxu0 0.0
    %1353 = vmatpush2.msra.mxu0 0.0
    %1354 = vmatprep.subr.mxu0 0.0
    %1355 = vmatpush2.msra.mxu0 0.0
    %1356 = vmatprep.subr.mxu0 0.0
    %1357 = vmatpush2.msra.mxu0 0.0
    %1358 = vmatprep.subr.mxu0 0.0
    %1359 = vmatpush2.msra.mxu0 0.0
    %1360 = vmatprep.mubr.f32.mxu0 0.0
    %1361 = vmatmul.mubr.f32.gmra.mxu0 %v1294
    %v1362 = vpop.f32.mrf.mxu0
    %v1363 = vadd.f32 %v202, %v1362
    %v1364 = vpop.f32.mrf.mxu0
    %1365 = vdwg.mxu0
    %1366 = vmatprep.subr.mxu0 0.0
    %1367 = vmatpush1.msra.mxu0 0.0
    %1368 = vmatprep.subr.mxu0 0.0
    %1369 = vmatpush1.msra.mxu0 0.0
    %1370 = vmatprep.subr.mxu0 0.0
    %1371 = vmatpush1.msra.mxu0 0.0
    %1372 = vmatprep.subr.mxu0 0.0
    %1373 = vmatpush1.msra.mxu0 0.0
    %1374 = vmatprep.subr.mxu0 0.0
    %1375 = vmatpush1.msra.mxu0 0.0
    %1376 = vmatprep.subr.mxu0 0.0
    %1377 = vmatpush1.msra.mxu0 0.0
    %1378 = vmatprep.subr.mxu0 0.0
    %1379 = vmatpush1.msra.mxu0 0.0
    %1380 = vmatprep.subr.mxu0 0.0
    %1381 = vmatpush1.msra.mxu0 0.0
    %1382 = vmatprep.subr.mxu0 0.0
    %1383 = vmatpush1.msra.mxu0 0.0
    %1384 = vmatprep.subr.mxu0 0.0
    %1385 = vmatpush1.msra.mxu0 0.0
    %1386 = vmatprep.subr.mxu0 0.0
    %1387 = vmatpush1.msra.mxu0 0.0
    %1388 = vmatprep.subr.mxu0 0.0
    %1389 = vmatpush1.msra.mxu0 0.0
    %1390 = vmatprep.subr.mxu0 0.0
    %1391 = vmatpush1.msra.mxu0 %v188
    %1392 = vmatprep.subr.mxu0 0.0
    %1393 = vmatpush1.msra.mxu0 %v187
    %1394 = vmatprep.subr.mxu0 0.0
    %1395 = vmatpush1.msra.mxu0 %v186
    %1396 = vmatprep.subr.mxu0 0.0
    %1397 = vmatpush1.msra.mxu0 %v185
    %1398 = vmatprep.subr.mxu0 0.0
    %1399 = vmatpush2.msra.mxu0 0.0
    %1400 = vmatprep.subr.mxu0 0.0
    %1401 = vmatpush2.msra.mxu0 0.0
    %1402 = vmatprep.subr.mxu0 0.0
    %1403 = vmatpush2.msra.mxu0 0.0
    %1404 = vmatprep.subr.mxu0 0.0
    %1405 = vmatpush2.msra.mxu0 0.0
    %1406 = vmatprep.subr.mxu0 0.0
    %1407 = vmatpush2.msra.mxu0 0.0
    %1408 = vmatprep.subr.mxu0 0.0
    %1409 = vmatpush2.msra.mxu0 0.0
    %1410 = vmatprep.subr.mxu0 0.0
    %1411 = vmatpush2.msra.mxu0 0.0
    %1412 = vmatprep.subr.mxu0 0.0
    %1413 = vmatpush2.msra.mxu0 0.0
    %1414 = vmatprep.subr.mxu0 0.0
    %1415 = vmatpush2.msra.mxu0 0.0
    %1416 = vmatprep.subr.mxu0 0.0
    %1417 = vmatpush2.msra.mxu0 0.0
    %1418 = vmatprep.subr.mxu0 0.0
    %1419 = vmatpush2.msra.mxu0 0.0
    %1420 = vmatprep.subr.mxu0 0.0
    %1421 = vmatpush2.msra.mxu0 0.0
    %1422 = vmatprep.subr.mxu0 0.0
    %1423 = vmatpush2.msra.mxu0 0.0
    %1424 = vmatprep.subr.mxu0 0.0
    %1425 = vmatpush2.msra.mxu0 0.0
    %1426 = vmatprep.subr.mxu0 0.0
    %1427 = vmatpush2.msra.mxu0 0.0
    %1428 = vmatprep.subr.mxu0 0.0
    %1429 = vmatpush2.msra.mxu0 0.0
    %1430 = vmatprep.mubr.f32.mxu0 0.0
    %1431 = vmatmul.mubr.f32.gmra.mxu0 %v1193
    %v1432 = vpop.f32.mrf.mxu0
    %v1433 = vadd.f32 0.0, %v1432
    %v1434 = vpop.f32.mrf.mxu0
    %1435 = vdwg.mxu0
    %v1436 = vadd.f32 %v172, %v1433
    %v1437 = vxor.u32 %v1436, 2147483648
    %v1438 = vmul.f32 %v1437, 1.442695
    %v1439 = vpow.pop %v1438
    %v1440 = vadd.f32 %v1439, 1.0
    %v1441 = vrcp.pop %v1440
    %v1442 = vmul.f32 1.0, %v1441
    %v1443 = vmul.f32 %v1442, 2.0
    %v1444 = vsub.f32 %v1443, 1.0
    %v1445 = vmul.f32 %v1442, %v1183
    %1447 = vrot.lane.b32.xlu0 %v1444, 64
    %v1448 = vpop.permute.xlu0 %1447
    %v1450 = vmul.f32 %v1442, %v1448
    %1452 = vrot.lane.b32.xlu0 %v1450, 32
    %v1453 = vpop.permute.xlu0 %1452
    %v1455 = vadd.f32 %v1445, %v1453
    %v1456 = vtanh.pop %v1455
    %1458 = vrot.lane.b32.xlu0 %v1456, 64
    %v1459 = vpop.permute.xlu0 %1458
    %v1461 = vmul.f32 %v1442, %v1459
    %1463 = vrot.lane.b32.xlu0 %v1461, 32
    %v1464 = vpop.permute.xlu0 %1463
    %v1465 = vsel %vm204, %v1464, 0
    %1467 = vmatprep.subr.mxu0 0.0
    %1468 = vmatpush1.msra.mxu0 0.0
    %1469 = vmatprep.subr.mxu0 0.0
    %1470 = vmatpush1.msra.mxu0 0.0
    %1471 = vmatprep.subr.mxu0 0.0
    %1472 = vmatpush1.msra.mxu0 0.0
    %1473 = vmatprep.subr.mxu0 0.0
    %1474 = vmatpush1.msra.mxu0 0.0
    %1475 = vmatprep.subr.mxu0 0.0
    %1476 = vmatpush1.msra.mxu0 0.0
    %1477 = vmatprep.subr.mxu0 0.0
    %1478 = vmatpush1.msra.mxu0 0.0
    %1479 = vmatprep.subr.mxu0 0.0
    %1480 = vmatpush1.msra.mxu0 0.0
    %1481 = vmatprep.subr.mxu0 0.0
    %1482 = vmatpush1.msra.mxu0 0.0
    %1483 = vmatprep.subr.mxu0 0.0
    %1484 = vmatpush1.msra.mxu0 0.0
    %1485 = vmatprep.subr.mxu0 0.0
    %1486 = vmatpush1.msra.mxu0 0.0
    %1487 = vmatprep.subr.mxu0 0.0
    %1488 = vmatpush1.msra.mxu0 0.0
    %1489 = vmatprep.subr.mxu0 0.0
    %1490 = vmatpush1.msra.mxu0 0.0
    %1491 = vmatprep.subr.mxu0 0.0
    %1492 = vmatpush1.msra.mxu0 %v192
    %1493 = vmatprep.subr.mxu0 0.0
    %1494 = vmatpush1.msra.mxu0 %v191
    %1495 = vmatprep.subr.mxu0 0.0
    %1496 = vmatpush1.msra.mxu0 %v190
    %1497 = vmatprep.subr.mxu0 0.0
    %1498 = vmatpush1.msra.mxu0 %v189
    %1499 = vmatprep.subr.mxu0 0.0
    %1500 = vmatpush2.msra.mxu0 0.0
    %1501 = vmatprep.subr.mxu0 0.0
    %1502 = vmatpush2.msra.mxu0 0.0
    %1503 = vmatprep.subr.mxu0 0.0
    %1504 = vmatpush2.msra.mxu0 0.0
    %1505 = vmatprep.subr.mxu0 0.0
    %1506 = vmatpush2.msra.mxu0 0.0
    %1507 = vmatprep.subr.mxu0 0.0
    %1508 = vmatpush2.msra.mxu0 0.0
    %1509 = vmatprep.subr.mxu0 0.0
    %1510 = vmatpush2.msra.mxu0 0.0
    %1511 = vmatprep.subr.mxu0 0.0
    %1512 = vmatpush2.msra.mxu0 0.0
    %1513 = vmatprep.subr.mxu0 0.0
    %1514 = vmatpush2.msra.mxu0 0.0
    %1515 = vmatprep.subr.mxu0 0.0
    %1516 = vmatpush2.msra.mxu0 0.0
    %1517 = vmatprep.subr.mxu0 0.0
    %1518 = vmatpush2.msra.mxu0 0.0
    %1519 = vmatprep.subr.mxu0 0.0
    %1520 = vmatpush2.msra.mxu0 0.0
    %1521 = vmatprep.subr.mxu0 0.0
    %1522 = vmatpush2.msra.mxu0 0.0
    %1523 = vmatprep.subr.mxu0 0.0
    %1524 = vmatpush2.msra.mxu0 0.0
    %1525 = vmatprep.subr.mxu0 0.0
    %1526 = vmatpush2.msra.mxu0 0.0
    %1527 = vmatprep.subr.mxu0 0.0
    %1528 = vmatpush2.msra.mxu0 0.0
    %1529 = vmatprep.subr.mxu0 0.0
    %1530 = vmatpush2.msra.mxu0 0.0
    %1531 = vmatprep.mubr.f32.mxu0 0.0
    %1532 = vmatmul.mubr.f32.gmra.mxu0 %v1465
    %v1533 = vpop.f32.mrf.mxu0
    %v1534 = vadd.f32 0.0, %v1533
    %v1535 = vpop.f32.mrf.mxu0
    %1536 = vdwg.mxu0
    %v1537 = vadd.f32 %v1363, %v1534
    %v1538 = vxor.u32 %v1537, 2147483648
    %v1539 = vmul.f32 %v1538, 1.442695
    %v1540 = vpow.pop %v1539
    %v1541 = vadd.f32 %v1540, 1.0
    %v1542 = vrcp.pop %v1541
    %v1543 = vmul.f32 1.0, %v1542
    %v1544 = vmul.f32 %v1543, 2.0
    %v1545 = vsub.f32 %v1544, 1.0
    %v1546 = vmul.f32 %v1543, %v1284
    %1548 = vrot.lane.b32.xlu0 %v1545, 64
    %v1549 = vpop.permute.xlu0 %1548
    %v1551 = vmul.f32 %v1543, %v1549
    %1553 = vrot.lane.b32.xlu0 %v1551, 32
    %v1554 = vpop.permute.xlu0 %1553
    %v1556 = vadd.f32 %v1546, %v1554
    %v1557 = vtanh.pop %v1556
    %1559 = vrot.lane.b32.xlu0 %v1557, 64
    %v1560 = vpop.permute.xlu0 %1559
    %v1562 = vmul.f32 %v1543, %v1560
    %1564 = vrot.lane.b32.xlu0 %v1562, 32
    %v1565 = vpop.permute.xlu0 %1564
    %v1566 = vsel %vm204, %v1565, 0
    %1568 = vmatprep.subr.mxu0 0.0
    %1569 = vmatpush1.msra.mxu0 0.0
    %1570 = vmatprep.subr.mxu0 0.0
    %1571 = vmatpush1.msra.mxu0 0.0
    %1572 = vmatprep.subr.mxu0 0.0
    %1573 = vmatpush1.msra.mxu0 0.0
    %1574 = vmatprep.subr.mxu0 0.0
    %1575 = vmatpush1.msra.mxu0 0.0
    %1576 = vmatprep.subr.mxu0 0.0
    %1577 = vmatpush1.msra.mxu0 0.0
    %1578 = vmatprep.subr.mxu0 0.0
    %1579 = vmatpush1.msra.mxu0 0.0
    %1580 = vmatprep.subr.mxu0 0.0
    %1581 = vmatpush1.msra.mxu0 0.0
    %1582 = vmatprep.subr.mxu0 0.0
    %1583 = vmatpush1.msra.mxu0 0.0
    %1584 = vmatprep.subr.mxu0 0.0
    %1585 = vmatpush1.msra.mxu0 0.0
    %1586 = vmatprep.subr.mxu0 0.0
    %1587 = vmatpush1.msra.mxu0 0.0
    %1588 = vmatprep.subr.mxu0 0.0
    %1589 = vmatpush1.msra.mxu0 0.0
    %1590 = vmatprep.subr.mxu0 0.0
    %1591 = vmatpush1.msra.mxu0 0.0
    %1592 = vmatprep.subr.mxu0 0.0
    %1593 = vmatpush1.msra.mxu0 %v196
    %1594 = vmatprep.subr.mxu0 0.0
    %1595 = vmatpush1.msra.mxu0 %v195
    %1596 = vmatprep.subr.mxu0 0.0
    %1597 = vmatpush1.msra.mxu0 %v194
    %1598 = vmatprep.subr.mxu0 0.0
    %1599 = vmatpush1.msra.mxu0 %v193
    %1600 = vmatprep.subr.mxu0 0.0
    %1601 = vmatpush2.msra.mxu0 0.0
    %1602 = vmatprep.subr.mxu0 0.0
    %1603 = vmatpush2.msra.mxu0 0.0
    %1604 = vmatprep.subr.mxu0 0.0
    %1605 = vmatpush2.msra.mxu0 0.0
    %1606 = vmatprep.subr.mxu0 0.0
    %1607 = vmatpush2.msra.mxu0 0.0
    %1608 = vmatprep.subr.mxu0 0.0
    %1609 = vmatpush2.msra.mxu0 0.0
    %1610 = vmatprep.subr.mxu0 0.0
    %1611 = vmatpush2.msra.mxu0 0.0
    %1612 = vmatprep.subr.mxu0 0.0
    %1613 = vmatpush2.msra.mxu0 0.0
    %1614 = vmatprep.subr.mxu0 0.0
    %1615 = vmatpush2.msra.mxu0 0.0
    %1616 = vmatprep.subr.mxu0 0.0
    %1617 = vmatpush2.msra.mxu0 0.0
    %1618 = vmatprep.subr.mxu0 0.0
    %1619 = vmatpush2.msra.mxu0 0.0
    %1620 = vmatprep.subr.mxu0 0.0
    %1621 = vmatpush2.msra.mxu0 0.0
    %1622 = vmatprep.subr.mxu0 0.0
    %1623 = vmatpush2.msra.mxu0 0.0
    %1624 = vmatprep.subr.mxu0 0.0
    %1625 = vmatpush2.msra.mxu0 0.0
    %1626 = vmatprep.subr.mxu0 0.0
    %1627 = vmatpush2.msra.mxu0 0.0
    %1628 = vmatprep.subr.mxu0 0.0
    %1629 = vmatpush2.msra.mxu0 0.0
    %1630 = vmatprep.subr.mxu0 0.0
    %1631 = vmatpush2.msra.mxu0 0.0
    %1632 = vmatprep.mubr.f32.mxu0 0.0
    %1633 = vmatmul.mubr.f32.gmra.mxu0 %v1566
    %v1634 = vpop.f32.mrf.mxu0
    %v1635 = vadd.f32 %v202, %v1634
    %v1636 = vpop.f32.mrf.mxu0
    %1637 = vdwg.mxu0
    %1638 = vmatprep.subr.mxu0 0.0
    %1639 = vmatpush1.msra.mxu0 0.0
    %1640 = vmatprep.subr.mxu0 0.0
    %1641 = vmatpush1.msra.mxu0 0.0
    %1642 = vmatprep.subr.mxu0 0.0
    %1643 = vmatpush1.msra.mxu0 0.0
    %1644 = vmatprep.subr.mxu0 0.0
    %1645 = vmatpush1.msra.mxu0 0.0
    %1646 = vmatprep.subr.mxu0 0.0
    %1647 = vmatpush1.msra.mxu0 0.0
    %1648 = vmatprep.subr.mxu0 0.0
    %1649 = vmatpush1.msra.mxu0 0.0
    %1650 = vmatprep.subr.mxu0 0.0
    %1651 = vmatpush1.msra.mxu0 0.0
    %1652 = vmatprep.subr.mxu0 0.0
    %1653 = vmatpush1.msra.mxu0 0.0
    %1654 = vmatprep.subr.mxu0 0.0
    %1655 = vmatpush1.msra.mxu0 0.0
    %1656 = vmatprep.subr.mxu0 0.0
    %1657 = vmatpush1.msra.mxu0 0.0
    %1658 = vmatprep.subr.mxu0 0.0
    %1659 = vmatpush1.msra.mxu0 0.0
    %1660 = vmatprep.subr.mxu0 0.0
    %1661 = vmatpush1.msra.mxu0 0.0
    %1662 = vmatprep.subr.mxu0 0.0
    %1663 = vmatpush1.msra.mxu0 %v188
    %1664 = vmatprep.subr.mxu0 0.0
    %1665 = vmatpush1.msra.mxu0 %v187
    %1666 = vmatprep.subr.mxu0 0.0
    %1667 = vmatpush1.msra.mxu0 %v186
    %1668 = vmatprep.subr.mxu0 0.0
    %1669 = vmatpush1.msra.mxu0 %v185
    %1670 = vmatprep.subr.mxu0 0.0
    %1671 = vmatpush2.msra.mxu0 0.0
    %1672 = vmatprep.subr.mxu0 0.0
    %1673 = vmatpush2.msra.mxu0 0.0
    %1674 = vmatprep.subr.mxu0 0.0
    %1675 = vmatpush2.msra.mxu0 0.0
    %1676 = vmatprep.subr.mxu0 0.0
    %1677 = vmatpush2.msra.mxu0 0.0
    %1678 = vmatprep.subr.mxu0 0.0
    %1679 = vmatpush2.msra.mxu0 0.0
    %1680 = vmatprep.subr.mxu0 0.0
    %1681 = vmatpush2.msra.mxu0 0.0
    %1682 = vmatprep.subr.mxu0 0.0
    %1683 = vmatpush2.msra.mxu0 0.0
    %1684 = vmatprep.subr.mxu0 0.0
    %1685 = vmatpush2.msra.mxu0 0.0
    %1686 = vmatprep.subr.mxu0 0.0
    %1687 = vmatpush2.msra.mxu0 0.0
    %1688 = vmatprep.subr.mxu0 0.0
    %1689 = vmatpush2.msra.mxu0 0.0
    %1690 = vmatprep.subr.mxu0 0.0
    %1691 = vmatpush2.msra.mxu0 0.0
    %1692 = vmatprep.subr.mxu0 0.0
    %1693 = vmatpush2.msra.mxu0 0.0
    %1694 = vmatprep.subr.mxu0 0.0
    %1695 = vmatpush2.msra.mxu0 0.0
    %1696 = vmatprep.subr.mxu0 0.0
    %1697 = vmatpush2.msra.mxu0 0.0
    %1698 = vmatprep.subr.mxu0 0.0
    %1699 = vmatpush2.msra.mxu0 0.0
    %1700 = vmatprep.subr.mxu0 0.0
    %1701 = vmatpush2.msra.mxu0 0.0
    %1702 = vmatprep.mubr.f32.mxu0 0.0
    %1703 = vmatmul.mubr.f32.gmra.mxu0 %v1465
    %v1704 = vpop.f32.mrf.mxu0
    %v1705 = vadd.f32 0.0, %v1704
    %v1706 = vpop.f32.mrf.mxu0
    %1707 = vdwg.mxu0
    %v1708 = vadd.f32 %v177, %v1705
    %v1709 = vxor.u32 %v1708, 2147483648
    %v1710 = vmul.f32 %v1709, 1.442695
    %v1711 = vpow.pop %v1710
    %v1712 = vadd.f32 %v1711, 1.0
    %v1713 = vrcp.pop %v1712
    %v1714 = vmul.f32 1.0, %v1713
    %v1715 = vmul.f32 %v1714, 2.0
    %v1716 = vsub.f32 %v1715, 1.0
    %v1717 = vmul.f32 %v1714, %v1455
    %1719 = vrot.lane.b32.xlu0 %v1716, 64
    %v1720 = vpop.permute.xlu0 %1719
    %v1722 = vmul.f32 %v1714, %v1720
    %1724 = vrot.lane.b32.xlu0 %v1722, 32
    %v1725 = vpop.permute.xlu0 %1724
    %v1727 = vadd.f32 %v1717, %v1725
    %v1728 = vtanh.pop %v1727
    %1730 = vrot.lane.b32.xlu0 %v1728, 64
    %v1731 = vpop.permute.xlu0 %1730
    %v1733 = vmul.f32 %v1714, %v1731
    %1735 = vrot.lane.b32.xlu0 %v1733, 32
    %v1736 = vpop.permute.xlu0 %1735
    %v1737 = vsel %vm204, %v1736, 0
    %1739 = vmatprep.subr.mxu0 0.0
    %1740 = vmatpush1.msra.mxu0 0.0
    %1741 = vmatprep.subr.mxu0 0.0
    %1742 = vmatpush1.msra.mxu0 0.0
    %1743 = vmatprep.subr.mxu0 0.0
    %1744 = vmatpush1.msra.mxu0 0.0
    %1745 = vmatprep.subr.mxu0 0.0
    %1746 = vmatpush1.msra.mxu0 0.0
    %1747 = vmatprep.subr.mxu0 0.0
    %1748 = vmatpush1.msra.mxu0 0.0
    %1749 = vmatprep.subr.mxu0 0.0
    %1750 = vmatpush1.msra.mxu0 0.0
    %1751 = vmatprep.subr.mxu0 0.0
    %1752 = vmatpush1.msra.mxu0 0.0
    %1753 = vmatprep.subr.mxu0 0.0
    %1754 = vmatpush1.msra.mxu0 0.0
    %1755 = vmatprep.subr.mxu0 0.0
    %1756 = vmatpush1.msra.mxu0 0.0
    %1757 = vmatprep.subr.mxu0 0.0
    %1758 = vmatpush1.msra.mxu0 0.0
    %1759 = vmatprep.subr.mxu0 0.0
    %1760 = vmatpush1.msra.mxu0 0.0
    %1761 = vmatprep.subr.mxu0 0.0
    %1762 = vmatpush1.msra.mxu0 0.0
    %1763 = vmatprep.subr.mxu0 0.0
    %1764 = vmatpush1.msra.mxu0 %v192
    %1765 = vmatprep.subr.mxu0 0.0
    %1766 = vmatpush1.msra.mxu0 %v191
    %1767 = vmatprep.subr.mxu0 0.0
    %1768 = vmatpush1.msra.mxu0 %v190
    %1769 = vmatprep.subr.mxu0 0.0
    %1770 = vmatpush1.msra.mxu0 %v189
    %1771 = vmatprep.subr.mxu0 0.0
    %1772 = vmatpush2.msra.mxu0 0.0
    %1773 = vmatprep.subr.mxu0 0.0
    %1774 = vmatpush2.msra.mxu0 0.0
    %1775 = vmatprep.subr.mxu0 0.0
    %1776 = vmatpush2.msra.mxu0 0.0
    %1777 = vmatprep.subr.mxu0 0.0
    %1778 = vmatpush2.msra.mxu0 0.0
    %1779 = vmatprep.subr.mxu0 0.0
    %1780 = vmatpush2.msra.mxu0 0.0
    %1781 = vmatprep.subr.mxu0 0.0
    %1782 = vmatpush2.msra.mxu0 0.0
    %1783 = vmatprep.subr.mxu0 0.0
    %1784 = vmatpush2.msra.mxu0 0.0
    %1785 = vmatprep.subr.mxu0 0.0
    %1786 = vmatpush2.msra.mxu0 0.0
    %1787 = vmatprep.subr.mxu0 0.0
    %1788 = vmatpush2.msra.mxu0 0.0
    %1789 = vmatprep.subr.mxu0 0.0
    %1790 = vmatpush2.msra.mxu0 0.0
    %1791 = vmatprep.subr.mxu0 0.0
    %1792 = vmatpush2.msra.mxu0 0.0
    %1793 = vmatprep.subr.mxu0 0.0
    %1794 = vmatpush2.msra.mxu0 0.0
    %1795 = vmatprep.subr.mxu0 0.0
    %1796 = vmatpush2.msra.mxu0 0.0
    %1797 = vmatprep.subr.mxu0 0.0
    %1798 = vmatpush2.msra.mxu0 0.0
    %1799 = vmatprep.subr.mxu0 0.0
    %1800 = vmatpush2.msra.mxu0 0.0
    %1801 = vmatprep.subr.mxu0 0.0
    %1802 = vmatpush2.msra.mxu0 0.0
    %1803 = vmatprep.mubr.f32.mxu0 0.0
    %1804 = vmatmul.mubr.f32.gmra.mxu0 %v1737
    %v1805 = vpop.f32.mrf.mxu0
    %v1806 = vadd.f32 0.0, %v1805
    %v1807 = vpop.f32.mrf.mxu0
    %1808 = vdwg.mxu0
    %v1809 = vadd.f32 %v1635, %v1806
    %v1810 = vxor.u32 %v1809, 2147483648
    %v1811 = vmul.f32 %v1810, 1.442695
    %v1812 = vpow.pop %v1811
    %v1813 = vadd.f32 %v1812, 1.0
    %v1814 = vrcp.pop %v1813
    %v1815 = vmul.f32 1.0, %v1814
    %v1816 = vmul.f32 %v1815, 2.0
    %v1817 = vsub.f32 %v1816, 1.0
    %v1818 = vmul.f32 %v1815, %v1556
    %1820 = vrot.lane.b32.xlu0 %v1817, 64
    %v1821 = vpop.permute.xlu0 %1820
    %v1823 = vmul.f32 %v1815, %v1821
    %1825 = vrot.lane.b32.xlu0 %v1823, 32
    %v1826 = vpop.permute.xlu0 %1825
    %v1828 = vadd.f32 %v1818, %v1826
    %v1829 = vtanh.pop %v1828
    %1831 = vrot.lane.b32.xlu0 %v1829, 64
    %v1832 = vpop.permute.xlu0 %1831
    %v1834 = vmul.f32 %v1815, %v1832
    %1836 = vrot.lane.b32.xlu0 %v1834, 32
    %v1837 = vpop.permute.xlu0 %1836
    %v1838 = vsel %vm204, %v1837, 0
    %1840 = vmatprep.subr.mxu0 0.0
    %1841 = vmatpush1.msra.mxu0 0.0
    %1842 = vmatprep.subr.mxu0 0.0
    %1843 = vmatpush1.msra.mxu0 0.0
    %1844 = vmatprep.subr.mxu0 0.0
    %1845 = vmatpush1.msra.mxu0 0.0
    %1846 = vmatprep.subr.mxu0 0.0
    %1847 = vmatpush1.msra.mxu0 0.0
    %1848 = vmatprep.subr.mxu0 0.0
    %1849 = vmatpush1.msra.mxu0 0.0
    %1850 = vmatprep.subr.mxu0 0.0
    %1851 = vmatpush1.msra.mxu0 0.0
    %1852 = vmatprep.subr.mxu0 0.0
    %1853 = vmatpush1.msra.mxu0 0.0
    %1854 = vmatprep.subr.mxu0 0.0
    %1855 = vmatpush1.msra.mxu0 0.0
    %1856 = vmatprep.subr.mxu0 0.0
    %1857 = vmatpush1.msra.mxu0 0.0
    %1858 = vmatprep.subr.mxu0 0.0
    %1859 = vmatpush1.msra.mxu0 0.0
    %1860 = vmatprep.subr.mxu0 0.0
    %1861 = vmatpush1.msra.mxu0 0.0
    %1862 = vmatprep.subr.mxu0 0.0
    %1863 = vmatpush1.msra.mxu0 0.0
    %1864 = vmatprep.subr.mxu0 0.0
    %1865 = vmatpush1.msra.mxu0 %v196
    %1866 = vmatprep.subr.mxu0 0.0
    %1867 = vmatpush1.msra.mxu0 %v195
    %1868 = vmatprep.subr.mxu0 0.0
    %1869 = vmatpush1.msra.mxu0 %v194
    %1870 = vmatprep.subr.mxu0 0.0
    %1871 = vmatpush1.msra.mxu0 %v193
    %1872 = vmatprep.subr.mxu0 0.0
    %1873 = vmatpush2.msra.mxu0 0.0
    %1874 = vmatprep.subr.mxu0 0.0
    %1875 = vmatpush2.msra.mxu0 0.0
    %1876 = vmatprep.subr.mxu0 0.0
    %1877 = vmatpush2.msra.mxu0 0.0
    %1878 = vmatprep.subr.mxu0 0.0
    %1879 = vmatpush2.msra.mxu0 0.0
    %1880 = vmatprep.subr.mxu0 0.0
    %1881 = vmatpush2.msra.mxu0 0.0
    %1882 = vmatprep.subr.mxu0 0.0
    %1883 = vmatpush2.msra.mxu0 0.0
    %1884 = vmatprep.subr.mxu0 0.0
    %1885 = vmatpush2.msra.mxu0 0.0
    %1886 = vmatprep.subr.mxu0 0.0
    %1887 = vmatpush2.msra.mxu0 0.0
    %1888 = vmatprep.subr.mxu0 0.0
    %1889 = vmatpush2.msra.mxu0 0.0
    %1890 = vmatprep.subr.mxu0 0.0
    %1891 = vmatpush2.msra.mxu0 0.0
    %1892 = vmatprep.subr.mxu0 0.0
    %1893 = vmatpush2.msra.mxu0 0.0
    %1894 = vmatprep.subr.mxu0 0.0
    %1895 = vmatpush2.msra.mxu0 0.0
    %1896 = vmatprep.subr.mxu0 0.0
    %1897 = vmatpush2.msra.mxu0 0.0
    %1898 = vmatprep.subr.mxu0 0.0
    %1899 = vmatpush2.msra.mxu0 0.0
    %1900 = vmatprep.subr.mxu0 0.0
    %1901 = vmatpush2.msra.mxu0 0.0
    %1902 = vmatprep.subr.mxu0 0.0
    %1903 = vmatpush2.msra.mxu0 0.0
    %1904 = vmatprep.mubr.f32.mxu0 0.0
    %1905 = vmatmul.mubr.f32.gmra.mxu0 %v1838
    %v1906 = vpop.f32.mrf.mxu0
    %v1907 = vadd.f32 %v202, %v1906
    %v1908 = vpop.f32.mrf.mxu0
    %1909 = vdwg.mxu0
    %1910 = vmatprep.subr.mxu0 0.0
    %1911 = vmatpush1.msra.mxu0 0.0
    %1912 = vmatprep.subr.mxu0 0.0
    %1913 = vmatpush1.msra.mxu0 0.0
    %1914 = vmatprep.subr.mxu0 0.0
    %1915 = vmatpush1.msra.mxu0 0.0
    %1916 = vmatprep.subr.mxu0 0.0
    %1917 = vmatpush1.msra.mxu0 0.0
    %1918 = vmatprep.subr.mxu0 0.0
    %1919 = vmatpush1.msra.mxu0 0.0
    %1920 = vmatprep.subr.mxu0 0.0
    %1921 = vmatpush1.msra.mxu0 0.0
    %1922 = vmatprep.subr.mxu0 0.0
    %1923 = vmatpush1.msra.mxu0 0.0
    %1924 = vmatprep.subr.mxu0 0.0
    %1925 = vmatpush1.msra.mxu0 0.0
    %1926 = vmatprep.subr.mxu0 0.0
    %1927 = vmatpush1.msra.mxu0 0.0
    %1928 = vmatprep.subr.mxu0 0.0
    %1929 = vmatpush1.msra.mxu0 0.0
    %1930 = vmatprep.subr.mxu0 0.0
    %1931 = vmatpush1.msra.mxu0 0.0
    %1932 = vmatprep.subr.mxu0 0.0
    %1933 = vmatpush1.msra.mxu0 0.0
    %1934 = vmatprep.subr.mxu0 0.0
    %1935 = vmatpush1.msra.mxu0 %v188
    %1936 = vmatprep.subr.mxu0 0.0
    %1937 = vmatpush1.msra.mxu0 %v187
    %1938 = vmatprep.subr.mxu0 0.0
    %1939 = vmatpush1.msra.mxu0 %v186
    %1940 = vmatprep.subr.mxu0 0.0
    %1941 = vmatpush1.msra.mxu0 %v185
    %1942 = vmatprep.subr.mxu0 0.0
    %1943 = vmatpush2.msra.mxu0 0.0
    %1944 = vmatprep.subr.mxu0 0.0
    %1945 = vmatpush2.msra.mxu0 0.0
    %1946 = vmatprep.subr.mxu0 0.0
    %1947 = vmatpush2.msra.mxu0 0.0
    %1948 = vmatprep.subr.mxu0 0.0
    %1949 = vmatpush2.msra.mxu0 0.0
    %1950 = vmatprep.subr.mxu0 0.0
    %1951 = vmatpush2.msra.mxu0 0.0
    %1952 = vmatprep.subr.mxu0 0.0
    %1953 = vmatpush2.msra.mxu0 0.0
    %1954 = vmatprep.subr.mxu0 0.0
    %1955 = vmatpush2.msra.mxu0 0.0
    %1956 = vmatprep.subr.mxu0 0.0
    %1957 = vmatpush2.msra.mxu0 0.0
    %1958 = vmatprep.subr.mxu0 0.0
    %1959 = vmatpush2.msra.mxu0 0.0
    %1960 = vmatprep.subr.mxu0 0.0
    %1961 = vmatpush2.msra.mxu0 0.0
    %1962 = vmatprep.subr.mxu0 0.0
    %1963 = vmatpush2.msra.mxu0 0.0
    %1964 = vmatprep.subr.mxu0 0.0
    %1965 = vmatpush2.msra.mxu0 0.0
    %1966 = vmatprep.subr.mxu0 0.0
    %1967 = vmatpush2.msra.mxu0 0.0
    %1968 = vmatprep.subr.mxu0 0.0
    %1969 = vmatpush2.msra.mxu0 0.0
    %1970 = vmatprep.subr.mxu0 0.0
    %1971 = vmatpush2.msra.mxu0 0.0
    %1972 = vmatprep.subr.mxu0 0.0
    %1973 = vmatpush2.msra.mxu0 0.0
    %1974 = vmatprep.mubr.f32.mxu0 0.0
    %1975 = vmatmul.mubr.f32.gmra.mxu0 %v1737
    %v1976 = vpop.f32.mrf.mxu0
    %v1977 = vadd.f32 0.0, %v1976
    %v1978 = vpop.f32.mrf.mxu0
    %1979 = vdwg.mxu0
    %v1980 = vadd.f32 %v182, %v1977
    %v1981 = vxor.u32 %v1980, 2147483648
    %v1982 = vmul.f32 %v1981, 1.442695
    %v1983 = vpow.pop %v1982
    %v1984 = vadd.f32 %v1983, 1.0
    %v1985 = vrcp.pop %v1984
    %v1986 = vmul.f32 1.0, %v1985
    %v1987 = vmul.f32 %v1986, 2.0
    %v1988 = vsub.f32 %v1987, 1.0
    %v1989 = vmul.f32 %v1986, %v1727
    %1991 = vrot.lane.b32.xlu0 %v1988, 64
    %v1992 = vpop.permute.xlu0 %1991
    %v1994 = vmul.f32 %v1986, %v1992
    %1996 = vrot.lane.b32.xlu0 %v1994, 32
    %v1997 = vpop.permute.xlu0 %1996
    %v1999 = vadd.f32 %v1989, %v1997
    %v2000 = vtanh.pop %v1999
    %2002 = vrot.lane.b32.xlu0 %v2000, 64
    %v2003 = vpop.permute.xlu0 %2002
    %v2005 = vmul.f32 %v1986, %v2003
    %2007 = vrot.lane.b32.xlu0 %v2005, 32
    %v2008 = vpop.permute.xlu0 %2007
    %v2009 = vsel %vm204, %v2008, 0
    %2011 = vmatprep.subr.mxu0 0.0
    %2012 = vmatpush1.msra.mxu0 0.0
    %2013 = vmatprep.subr.mxu0 0.0
    %2014 = vmatpush1.msra.mxu0 0.0
    %2015 = vmatprep.subr.mxu0 0.0
    %2016 = vmatpush1.msra.mxu0 0.0
    %2017 = vmatprep.subr.mxu0 0.0
    %2018 = vmatpush1.msra.mxu0 0.0
    %2019 = vmatprep.subr.mxu0 0.0
    %2020 = vmatpush1.msra.mxu0 0.0
    %2021 = vmatprep.subr.mxu0 0.0
    %2022 = vmatpush1.msra.mxu0 0.0
    %2023 = vmatprep.subr.mxu0 0.0
    %2024 = vmatpush1.msra.mxu0 0.0
    %2025 = vmatprep.subr.mxu0 0.0
    %2026 = vmatpush1.msra.mxu0 0.0
    %2027 = vmatprep.subr.mxu0 0.0
    %2028 = vmatpush1.msra.mxu0 0.0
    %2029 = vmatprep.subr.mxu0 0.0
    %2030 = vmatpush1.msra.mxu0 0.0
    %2031 = vmatprep.subr.mxu0 0.0
    %2032 = vmatpush1.msra.mxu0 0.0
    %2033 = vmatprep.subr.mxu0 0.0
    %2034 = vmatpush1.msra.mxu0 0.0
    %2035 = vmatprep.subr.mxu0 0.0
    %2036 = vmatpush1.msra.mxu0 %v192
    %2037 = vmatprep.subr.mxu0 0.0
    %2038 = vmatpush1.msra.mxu0 %v191
    %2039 = vmatprep.subr.mxu0 0.0
    %2040 = vmatpush1.msra.mxu0 %v190
    %2041 = vmatprep.subr.mxu0 0.0
    %2042 = vmatpush1.msra.mxu0 %v189
    %2043 = vmatprep.subr.mxu0 0.0
    %2044 = vmatpush2.msra.mxu0 0.0
    %2045 = vmatprep.subr.mxu0 0.0
    %2046 = vmatpush2.msra.mxu0 0.0
    %2047 = vmatprep.subr.mxu0 0.0
    %2048 = vmatpush2.msra.mxu0 0.0
    %2049 = vmatprep.subr.mxu0 0.0
    %2050 = vmatpush2.msra.mxu0 0.0
    %2051 = vmatprep.subr.mxu0 0.0
    %2052 = vmatpush2.msra.mxu0 0.0
    %2053 = vmatprep.subr.mxu0 0.0
    %2054 = vmatpush2.msra.mxu0 0.0
    %2055 = vmatprep.subr.mxu0 0.0
    %2056 = vmatpush2.msra.mxu0 0.0
    %2057 = vmatprep.subr.mxu0 0.0
    %2058 = vmatpush2.msra.mxu0 0.0
    %2059 = vmatprep.subr.mxu0 0.0
    %2060 = vmatpush2.msra.mxu0 0.0
    %2061 = vmatprep.subr.mxu0 0.0
    %2062 = vmatpush2.msra.mxu0 0.0
    %2063 = vmatprep.subr.mxu0 0.0
    %2064 = vmatpush2.msra.mxu0 0.0
    %2065 = vmatprep.subr.mxu0 0.0
    %2066 = vmatpush2.msra.mxu0 0.0
    %2067 = vmatprep.subr.mxu0 0.0
    %2068 = vmatpush2.msra.mxu0 0.0
    %2069 = vmatprep.subr.mxu0 0.0
    %2070 = vmatpush2.msra.mxu0 0.0
    %2071 = vmatprep.subr.mxu0 0.0
    %2072 = vmatpush2.msra.mxu0 0.0
    %2073 = vmatprep.subr.mxu0 0.0
    %2074 = vmatpush2.msra.mxu0 0.0
    %2075 = vmatprep.mubr.f32.mxu0 0.0
    %2076 = vmatmul.mubr.f32.gmra.mxu0 %v2009
    %v2077 = vpop.f32.mrf.mxu0
    %v2078 = vadd.f32 0.0, %v2077
    %v2079 = vpop.f32.mrf.mxu0
    %2080 = vdwg.mxu0
    %v2081 = vadd.f32 %v1907, %v2078
    %v2082 = vxor.u32 %v2081, 2147483648
    %v2083 = vmul.f32 %v2082, 1.442695
    %v2084 = vpow.pop %v2083
    %v2085 = vadd.f32 %v2084, 1.0
    %v2086 = vrcp.pop %v2085
    %v2087 = vmul.f32 1.0, %v2086
    %v2088 = vmul.f32 %v2087, 2.0
    %v2089 = vsub.f32 %v2088, 1.0
    %v2090 = vmul.f32 %v2087, %v1828
    %2092 = vrot.lane.b32.xlu0 %v2089, 64
    %v2093 = vpop.permute.xlu0 %2092
    %v2095 = vmul.f32 %v2087, %v2093
    %2097 = vrot.lane.b32.xlu0 %v2095, 32
    %v2098 = vpop.permute.xlu0 %2097
    %v2100 = vadd.f32 %v2090, %v2098
    %v2101 = vtanh.pop %v2100
    %2103 = vrot.lane.b32.xlu0 %v2101, 64
    %v2104 = vpop.permute.xlu0 %2103
    %v2106 = vmul.f32 %v2087, %v2104
    %v2107 = vld [vmem:[%s7] sm:$0xff]
    %v2108 = vld [vmem:[%s7 + $0x8] sm:$0xff]
    %v2109 = vld [vmem:[%s7 + $0x10] sm:$0xff]
    %v2110 = vld [vmem:[%s7 + $0x18] sm:$0xff]
    %v2111 = vld [vmem:[%s8] sm:$0x1]
    %v2113 = vlaneseq
    %v2114 = vshrl.u32 %v2113, 7
    %v2115 = vsub.s32 0, %v2114
    %v2116 = vrot.slane %v2111, %v2115
    %2119 = vrot.lane.b32.xlu0 %v2106, 32
    %v2120 = vpop.permute.xlu0 %2119
    %v2121 = vsel %vm204, %v2120, 0
    %2123 = vmatprep.subr.mxu0 0.0
    %2124 = vmatpush1.msra.mxu0 0.0
    %2125 = vmatprep.subr.mxu0 0.0
    %2126 = vmatpush1.msra.mxu0 0.0
    %2127 = vmatprep.subr.mxu0 0.0
    %2128 = vmatpush1.msra.mxu0 0.0
    %2129 = vmatprep.subr.mxu0 0.0
    %2130 = vmatpush1.msra.mxu0 0.0
    %2131 = vmatprep.subr.mxu0 0.0
    %2132 = vmatpush1.msra.mxu0 0.0
    %2133 = vmatprep.subr.mxu0 0.0
    %2134 = vmatpush1.msra.mxu0 0.0
    %2135 = vmatprep.subr.mxu0 0.0
    %2136 = vmatpush1.msra.mxu0 0.0
    %2137 = vmatprep.subr.mxu0 0.0
    %2138 = vmatpush1.msra.mxu0 0.0
    %2139 = vmatprep.subr.mxu0 0.0
    %2140 = vmatpush1.msra.mxu0 0.0
    %2141 = vmatprep.subr.mxu0 0.0
    %2142 = vmatpush1.msra.mxu0 0.0
    %2143 = vmatprep.subr.mxu0 0.0
    %2144 = vmatpush1.msra.mxu0 0.0
    %2145 = vmatprep.subr.mxu0 0.0
    %2146 = vmatpush1.msra.mxu0 0.0
    %2147 = vmatprep.subr.mxu0 0.0
    %2148 = vmatpush1.msra.mxu0 %v2110
    %2149 = vmatprep.subr.mxu0 0.0
    %2150 = vmatpush1.msra.mxu0 %v2109
    %2151 = vmatprep.subr.mxu0 0.0
    %2152 = vmatpush1.msra.mxu0 %v2108
    %2153 = vmatprep.subr.mxu0 0.0
    %2154 = vmatpush1.msra.mxu0 %v2107
    %2155 = vmatprep.subr.mxu0 0.0
    %2156 = vmatpush2.msra.mxu0 0.0
    %2157 = vmatprep.subr.mxu0 0.0
    %2158 = vmatpush2.msra.mxu0 0.0
    %2159 = vmatprep.subr.mxu0 0.0
    %2160 = vmatpush2.msra.mxu0 0.0
    %2161 = vmatprep.subr.mxu0 0.0
    %2162 = vmatpush2.msra.mxu0 0.0
    %2163 = vmatprep.subr.mxu0 0.0
    %2164 = vmatpush2.msra.mxu0 0.0
    %2165 = vmatprep.subr.mxu0 0.0
    %2166 = vmatpush2.msra.mxu0 0.0
    %2167 = vmatprep.subr.mxu0 0.0
    %2168 = vmatpush2.msra.mxu0 0.0
    %2169 = vmatprep.subr.mxu0 0.0
    %2170 = vmatpush2.msra.mxu0 0.0
    %2171 = vmatprep.subr.mxu0 0.0
    %2172 = vmatpush2.msra.mxu0 0.0
    %2173 = vmatprep.subr.mxu0 0.0
    %2174 = vmatpush2.msra.mxu0 0.0
    %2175 = vmatprep.subr.mxu0 0.0
    %2176 = vmatpush2.msra.mxu0 0.0
    %2177 = vmatprep.subr.mxu0 0.0
    %2178 = vmatpush2.msra.mxu0 0.0
    %2179 = vmatprep.subr.mxu0 0.0
    %2180 = vmatpush2.msra.mxu0 0.0
    %2181 = vmatprep.subr.mxu0 0.0
    %2182 = vmatpush2.msra.mxu0 0.0
    %2183 = vmatprep.subr.mxu0 0.0
    %2184 = vmatpush2.msra.mxu0 0.0
    %2185 = vmatprep.subr.mxu0 0.0
    %2186 = vmatpush2.msra.mxu0 0.0
    %2187 = vmatprep.mubr.f32.mxu0 0.0
    %2188 = vmatmul.mubr.f32.gmra.mxu0 %v2121
    %v2189 = vpop.f32.mrf.mxu0
    %v2190 = vadd.f32 %v2116, %v2189
    %v2191 = vpop.f32.mrf.mxu0
    %2192 = vdwg.mxu0
    %2193 = vst [vmem:[%s9] sm:$0xff] %v2190
    // Predicated region
    $region42: #{lstm_forward.1} parent=1 // pred_check
      _
    $region43: #{lstm_forward.1} parent=1 // pred_check_branch
      %2195 = sbr.rel (0) target = $region45
    $region44: #{lstm_forward.1} parent=1 // pred_region
      _
    $region45: #{lstm_forward.1} parent=1 // pred_fallthru
      _
    // Predicated region
    $region46: #{lstm_forward.1} parent=1 // pred_check
      _
    $region47: #{lstm_forward.1} parent=1 // pred_check_branch
      %2197 = sbr.rel (0) target = $region49
    $region48: #{lstm_forward.1} parent=1 // pred_region
      _
    $region49: #{lstm_forward.1} parent=1 // pred_fallthru
      _
    %2198 = vsyncpa [#allocation3], 1

</llo_original>
